<compile_context>
chip_gen: v7x
topology: tpu7x:2x2x1
jax: 0.10.0
libtpu: 0.0.40
codegen_flags: <defaults>
</compile_context>

<pallas_src>
import jax
import jax.numpy as jnp
from jax.experimental import pallas as pl
from jax.experimental.pallas import tpu as pltpu

NCLASSES = 20
NCLASSES_PAD = 128   # lane-dense output slab; sliced back to 20 outside kernel
FEAT = 2048
HID = 512


def _round_up(x, m):
    return (x + m - 1) // m * m


def _head_kernel(f1_ref, f2_ref, wc1_ref, wc2_ref, beff_ref, out_ref):
    # f1, f2   : [TB, 2048] bf16 (batch-tiled, auto double-buffered)
    # wc1, wc2 : [2048, 128] bf16 (VMEM-resident: index_map -> (0, 0))
    # beff     : [1, 128] f32
    # out      : [TB, 128] f32
    out = jnp.dot(f1_ref[...], wc1_ref[...],
                  preferred_element_type=jnp.float32)        # [TB, 128] f32
    out = out + jnp.dot(f2_ref[...], wc2_ref[...],
                        preferred_element_type=jnp.float32)
    out_ref[...] = (out + beff_ref[...]).astype(out_ref.dtype)


def pack_params(params):
    """One-time precompute: collapse the whole head (valid: no nonlinearity).

      cat(f1@W1+b1, f2@W2+b2) @ Wf + bf
        = f1 @ (W1@Wf[:512]) + f2 @ (W2@Wf[512:]) + (bf + b1@Wf[:512] + b2@Wf[512:])

    All folding is done in f32; only the final collapsed tensors are cast bf16.
    """
    w1t, b1, w2t, b2, wft, bf = params
    wf1 = wft[:HID, :]                           # [512, 20] f32
    wf2 = wft[HID:, :]                           # [512, 20] f32
    wc1 = w1t @ wf1                              # [2048, 20] f32
    wc2 = w2t @ wf2                              # [2048, 20] f32
    b_eff = bf + b1 @ wf1 + b2 @ wf2             # [1, 20] f32
    pad = NCLASSES_PAD - NCLASSES
    wc1p = jnp.pad(wc1, ((0, 0), (0, pad)))
    wc2p = jnp.pad(wc2, ((0, 0), (0, pad)))
    beffp = jnp.pad(b_eff, ((0, 0), (0, pad)))
    return (wc1p.astype(jnp.bfloat16), wc2p.astype(jnp.bfloat16),
            beffp.astype(jnp.float32))


def net_head(f1, f2, packed, *, block_b=512):
    """Fused head: two Linear(2048->512), concat, Linear(1024->20) (collapsed)."""
    wc1, wc2, beff = packed
    B = f1.shape[0]
    # Batch tile: multiple of 16 (bf16 sublane packing) regardless of caller's
    # block_b, capped at the (rounded-up) batch so tiny batches get one step.
    tb = min(_round_up(block_b, 16), _round_up(B, 16))
    bp = _round_up(B, tb)
    if bp != B:
        f1 = jnp.pad(f1, ((0, bp - B), (0, 0)))
        f2 = jnp.pad(f2, ((0, bp - B), (0, 0)))
    f1 = f1.astype(jnp.bfloat16)
    f2 = f2.astype(jnp.bfloat16)

    grid_steps = bp // tb
    feat_spec = pl.BlockSpec((tb, FEAT), lambda i: (i, 0))
    resident = lambda shape: pl.BlockSpec(shape, lambda i: (0, 0))
    # Multi-step grid: shard batch across TensorCores (v7x). Single step:
    # "arbitrary" avoids each core pulling its own copy of the weights.
    semantics = ("parallel",) if grid_steps > 1 else ("arbitrary",)

    out = pl.pallas_call(
        _head_kernel,
        out_shape=jax.ShapeDtypeStruct((bp, NCLASSES_PAD), jnp.float32),
        grid=(grid_steps,),
        in_specs=[feat_spec, feat_spec,
                  resident((FEAT, NCLASSES_PAD)), resident((FEAT, NCLASSES_PAD)),
                  resident((1, NCLASSES_PAD))],
        out_specs=pl.BlockSpec((tb, NCLASSES_PAD), lambda i: (i, 0)),
        compiler_params=pltpu.CompilerParams(dimension_semantics=semantics),
    )(f1, f2, wc1, wc2, beff)
    return out[:B, :NCLASSES]


def init_params(key):
    """Deterministic init matching nn.Linear defaults (U[-1/sqrt(fan_in), ...])."""
    ks = jax.random.split(key, 6)

    def linear(kw, kb, fan_in, fan_out):
        bound = 1.0 / jnp.sqrt(fan_in)
        # stored transposed: [in, out]
        w = jax.random.uniform(kw, (fan_in, fan_out), jnp.float32, -bound, bound)
        b = jax.random.uniform(kb, (1, fan_out), jnp.float32, -bound, bound)
        return w, b

    w1t, b1 = linear(ks[0], ks[1], FEAT, HID)          # final1: Linear(2048, 512)
    w2t, b2 = linear(ks[2], ks[3], FEAT, HID)          # final2: Linear(2048, 512)
    wft, bf = linear(ks[4], ks[5], 2 * HID, NCLASSES)  # final : Linear(1024, 20)
    return (w1t, b1, w2t, b2, wft, bf)


def reference(f1, f2, params):
    w1t, b1, w2t, b2, wft, bf = params
    h1 = f1 @ w1t + b1
    h2 = f2 @ w2t + b2
    return jnp.concatenate([h1, h2], axis=-1) @ wft + bf


if __name__ == "__main__":
    key = jax.random.PRNGKey(0)
    kp, kf1, kf2 = jax.random.split(key, 3)

    params = init_params(kp)
    packed = pack_params(params)

    # Backbone outputs (stand-ins for res152(x).view(-1,2048), res101(x).view(-1,2048)).
    B = 2
    f1 = jax.random.normal(kf1, (B, FEAT), jnp.float32)
    f2 = jax.random.normal(kf2, (B, FEAT), jnp.float32)

    out = jax.block_until_ready(net_head(f1, f2, packed))
    assert out.shape == (B, NCLASSES), out.shape
    ref = reference(f1, f2, params)
    # bf16 collapsed weights / bf16 features with f32 accumulation -> loosened tolerance.
    assert jnp.allclose(out, ref, atol=5e-2, rtol=5e-2), "mismatch vs reference"

    # Exercise the batch grid (padding + multiple pipelined steps + resident weights).
    B2 = 20
    g1 = jax.random.normal(jax.random.PRNGKey(1), (B2, FEAT), jnp.float32)
    g2 = jax.random.normal(jax.random.PRNGKey(2), (B2, FEAT), jnp.float32)
    out2 = jax.block_until_ready(net_head(g1, g2, packed, block_b=16))
    ref2 = reference(g1, g2, params)
    assert out2.shape == (B2, NCLASSES), out2.shape
    assert jnp.allclose(out2, ref2, atol=5e-2, rtol=5e-2), "mismatch (gridded)"

    # Also check that an odd caller-supplied block_b lowers fine (rounded to 16).
    out3 = jax.block_until_ready(net_head(g1, g2, packed, block_b=100))
    assert jnp.allclose(out3, ref2, atol=5e-2, rtol=5e-2), "mismatch (odd block_b)"

    print("KERNEL_OK")
</pallas_src>

<mosaic_0001>
module attributes {stable_mosaic.version = 11 : i64} {
  func.func @_head_kernel(%arg0: i32, %arg1: memref<16x2048xbf16, #tpu.memory_space<vmem>>, %arg2: memref<16x2048xbf16, #tpu.memory_space<vmem>>, %arg3: memref<2048x128xbf16, #tpu.memory_space<vmem>>, %arg4: memref<2048x128xbf16, #tpu.memory_space<vmem>>, %arg5: memref<1x128xf32, #tpu.memory_space<vmem>>, %arg6: memref<16x128xf32, #tpu.memory_space<vmem>>) attributes {dimension_semantics = [#tpu.dimension_semantics<arbitrary>], iteration_bounds = array<i64: 1>, scalar_prefetch = 0 : i64, scratch_operands = 0 : i64, tpu.core_type = #tpu.core_type<tc>, window_params = [{transform_indices = @transform_0, window_bounds = array<i64: 16, 2048>}, {transform_indices = @transform_1, window_bounds = array<i64: 16, 2048>}, {pipeline_mode = #tpu.pipeline_mode<synchronous>, transform_indices = @transform_2, window_bounds = array<i64: 2048, 128>}, {pipeline_mode = #tpu.pipeline_mode<synchronous>, transform_indices = @transform_3, window_bounds = array<i64: 2048, 128>}, {pipeline_mode = #tpu.pipeline_mode<synchronous>, transform_indices = @transform_4, window_bounds = array<i64: 1, 128>}, {transform_indices = @transform_5, window_bounds = array<i64: 16, 128>}]} {
    %c0 = arith.constant 0 : index
    %c0_0 = arith.constant 0 : index
    %0 = vector.load %arg1[%c0, %c0_0] : memref<16x2048xbf16, #tpu.memory_space<vmem>>, vector<16x2048xbf16>
    %c0_1 = arith.constant 0 : index
    %c0_2 = arith.constant 0 : index
    %1 = vector.load %arg3[%c0_1, %c0_2] : memref<2048x128xbf16, #tpu.memory_space<vmem>>, vector<2048x128xbf16>
    %cst = arith.constant dense<0.000000e+00> : vector<16x128xf32>
    %2 = tpu.matmul %0, %1, %cst {dimension_numbers = #tpu.dot_dimension_numbers<[1], [0], [0], [1], [0, 0, 1, 1], [], []>} : vector<16x2048xbf16>, vector<2048x128xbf16>, vector<16x128xf32> -> vector<16x128xf32>
    %c0_3 = arith.constant 0 : index
    %c0_4 = arith.constant 0 : index
    %3 = vector.load %arg2[%c0_3, %c0_4] : memref<16x2048xbf16, #tpu.memory_space<vmem>>, vector<16x2048xbf16>
    %c0_5 = arith.constant 0 : index
    %c0_6 = arith.constant 0 : index
    %4 = vector.load %arg4[%c0_5, %c0_6] : memref<2048x128xbf16, #tpu.memory_space<vmem>>, vector<2048x128xbf16>
    %cst_7 = arith.constant dense<0.000000e+00> : vector<16x128xf32>
    %5 = tpu.matmul %3, %4, %cst_7 {dimension_numbers = #tpu.dot_dimension_numbers<[1], [0], [0], [1], [0, 0, 1, 1], [], []>} : vector<16x2048xbf16>, vector<2048x128xbf16>, vector<16x128xf32> -> vector<16x128xf32>
    %6 = arith.addf %2, %5 : vector<16x128xf32>
    %c0_8 = arith.constant 0 : index
    %c0_9 = arith.constant 0 : index
    %7 = vector.load %arg5[%c0_8, %c0_9] : memref<1x128xf32, #tpu.memory_space<vmem>>, vector<1x128xf32>
    %8 = vector.broadcast %7 : vector<1x128xf32> to vector<16x128xf32>
    %9 = arith.addf %6, %8 : vector<16x128xf32>
    %c0_10 = arith.constant 0 : index
    %c0_11 = arith.constant 0 : index
    %10 = vector.load %arg6[%c0_10, %c0_11] : memref<16x128xf32, #tpu.memory_space<vmem>>, vector<16x128xf32>
    tpu.vector_store %arg6[%c0_10, %c0_11], %9 {strides = array<i32>} : memref<16x128xf32, #tpu.memory_space<vmem>>, vector<16x128xf32>,
    return
  }
  func.func @transform_0(%arg0: i32) -> (i32, i32) {
    %c0_i32 = arith.constant 0 : i32
    %c0_i32_0 = arith.constant 0 : i32
    return %arg0, %c0_i32 : i32, i32
  }
  func.func @transform_1(%arg0: i32) -> (i32, i32) {
    %c0_i32 = arith.constant 0 : i32
    %c0_i32_0 = arith.constant 0 : i32
    return %arg0, %c0_i32 : i32, i32
  }
  func.func @transform_2(%arg0: i32) -> (i32, i32) {
    %c0_i32 = arith.constant 0 : i32
    %c0_i32_0 = arith.constant 0 : i32
    %c0_i32_1 = arith.constant 0 : i32
    return %c0_i32, %c0_i32_0 : i32, i32
  }
  func.func @transform_3(%arg0: i32) -> (i32, i32) {
    %c0_i32 = arith.constant 0 : i32
    %c0_i32_0 = arith.constant 0 : i32
    %c0_i32_1 = arith.constant 0 : i32
    return %c0_i32, %c0_i32_0 : i32, i32
  }
  func.func @transform_4(%arg0: i32) -> (i32, i32) {
    %c0_i32 = arith.constant 0 : i32
    %c0_i32_0 = arith.constant 0 : i32
    %c0_i32_1 = arith.constant 0 : i32
    return %c0_i32, %c0_i32_0 : i32, i32
  }
  func.func @transform_5(%arg0: i32) -> (i32, i32) {
    %c0_i32 = arith.constant 0 : i32
    %c0_i32_0 = arith.constant 0 : i32
    return %arg0, %c0_i32 : i32, i32
  }
}

</mosaic_0001>

<llo_original>
// kernel: tpu_custom_call.1
$region0: #{tpu_custom_call.1}
  #allocation0 [shape = 'u32[]', space=smem, size = 0x4, offset = 0x4, fixed_abs, tag = 'smem constant byte address 0x4 - core index']
  #allocation1 [shape = 'u32[144,128]{1,0:T(1,128)}', space=vmem, size = 0x12000, scoped, tag = 'internal scratch']
  %s0 = inlined_call_operand.hbm [shape: bf16[16,2048], index: 0, kind: input, shape index: {}]
  %s1 = inlined_call_operand.hbm [shape: bf16[16,2048], index: 1, kind: input, shape index: {}]
  %s2 = inlined_call_operand.hbm [shape: bf16[2048,128], index: 2, kind: input, shape index: {}]
  %s3 = inlined_call_operand.hbm [shape: bf16[2048,128], index: 3, kind: input, shape index: {}]
  %s4 = inlined_call_operand.vmem [shape: f32[1,128], index: 4, kind: input, shape index: {}]
  %s5 = inlined_call_operand.hbm [shape: f32[16,128], index: 5, kind: output, shape index: {}]
  %s6 = sld [smem:[#allocation0]]
  $region46: #{tpu_custom_call.1} parent=0
    _
  %s8 = ssub.s32 1, %s6
  %s9 = scalar_select 0, %s8, %s6
  $region1: #{tpu_custom_call.1} parent=0
    #allocation2 [shape = 'u8[65536]{0}', space=vmem, size = 0x10000, scoped, tag = 'input window, operand 0, single buffered']
    #allocation3 [shape = 's32[1]{0}', space=sflag, size = 0x4, scoped, tag = 'scoped memory for tpu_custom_call.1']
    #allocation4 [shape = 's32[1]{0}', space=sflag, size = 0x4, scoped, tag = 'scoped memory for tpu_custom_call.1']
    #allocation5 [shape = 'u8[65536]{0}', space=vmem, size = 0x10000, scoped, tag = 'input window, operand 1, single buffered']
    #allocation6 [shape = 's32[1]{0}', space=sflag, size = 0x4, scoped, tag = 'scoped memory for tpu_custom_call.1']
    #allocation7 [shape = 'u8[524288]{0}', space=vmem, size = 0x80000, scoped, tag = 'input window, operand 2, single buffered']
    #allocation8 [shape = 'u8[524288]{0}', space=vmem, size = 0x80000, scoped, tag = 'input window, operand 3, single buffered']
    #allocation9 [shape = 's32[1]{0}', space=sflag, size = 0x4, scoped, tag = 'scoped memory for tpu_custom_call.1']
    #allocation10 [shape = 'u8[8192]{0}', space=vmem, size = 0x2000, scoped, tag = 'output window, operand 0, single buffered']
    %10 = vsyncpa [#allocation3], 0
    %11 = vsyncpa [#allocation6], 0
    %12 = vsyncpa [#allocation9], 0
    %13 = vsyncpa [#allocation4], 0
    // Predicated region
    $region2: #{tpu_custom_call.1} parent=1 // pred_check
      _
    $region3: #{tpu_custom_call.1} parent=1 // pred_check_branch
      %15 = sbr.rel (0) target = $region5
    $region4: #{tpu_custom_call.1} parent=1 // pred_region
      %s17 = ssub.s32 2048, 2048
      %18 = vsyncadd [#allocation3], %s17
      %s19 = sshll.u32 [#allocation2], 4
      %s20 = int_to_ptr.vmem [resolvable:$true] %s19
      %25 = dma.hbm_to_vmem [thread:$0]  %s0, 2048, %s20, [#allocation3], 1024, 1024, 64
    $region5: #{tpu_custom_call.1} parent=1 // pred_fallthru
      _
    // Predicated region
    $region6: #{tpu_custom_call.1} parent=1 // pred_check
      _
    $region7: #{tpu_custom_call.1} parent=1 // pred_check_branch
      %27 = sbr.rel (0) target = $region9
    $region8: #{tpu_custom_call.1} parent=1 // pred_region
      %s29 = ssub.s32 2048, 2048
      %30 = vsyncadd [#allocation6], %s29
      %s31 = sshll.u32 [#allocation5], 4
      %s32 = int_to_ptr.vmem [resolvable:$true] %s31
      %37 = dma.hbm_to_vmem [thread:$0]  %s1, 2048, %s32, [#allocation6], 1024, 1024, 64
    $region9: #{tpu_custom_call.1} parent=1 // pred_fallthru
      _
    // Predicated region
    $region10: #{tpu_custom_call.1} parent=1 // pred_check
      _
    $region11: #{tpu_custom_call.1} parent=1 // pred_check_branch
      %39 = sbr.rel (0) target = $region13
    $region12: #{tpu_custom_call.1} parent=1 // pred_region
      %s41 = ssub.s32 16384, 16384
      %42 = vsyncadd [#allocation6], %s41
      %s43 = sshll.u32 [#allocation7], 4
      %s44 = int_to_ptr.vmem [resolvable:$true] %s43
      %49 = dma.hbm_to_vmem [thread:$0]  %s2, 16384, %s44, [#allocation6], 64, 64, 4
    $region13: #{tpu_custom_call.1} parent=1 // pred_fallthru
      _
    // Predicated region
    $region14: #{tpu_custom_call.1} parent=1 // pred_check
      _
    $region15: #{tpu_custom_call.1} parent=1 // pred_check_branch
      %51 = sbr.rel (0) target = $region17
    $region16: #{tpu_custom_call.1} parent=1 // pred_region
      %s53 = ssub.s32 16384, 16384
      %54 = vsyncadd [#allocation9], %s53
      %s55 = sshll.u32 [#allocation8], 4
      %s56 = int_to_ptr.vmem [resolvable:$true] %s55
      %61 = dma.hbm_to_vmem [thread:$0]  %s3, 16384, %s56, [#allocation9], 64, 64, 4
    $region17: #{tpu_custom_call.1} parent=1 // pred_fallthru
      _
    // Predicated region
    $region18: #{tpu_custom_call.1} parent=1 // pred_check
      _
    $region19: #{tpu_custom_call.1} parent=1 // pred_check_branch
      %63 = sbr.rel (0) target = $region21
    $region20: #{tpu_custom_call.1} parent=1 // pred_region
      _
    $region21: #{tpu_custom_call.1} parent=1 // pred_fallthru
      _
    // Predicated region
    $region22: #{tpu_custom_call.1} parent=1 // pred_check
      _
    $region23: #{tpu_custom_call.1} parent=1 // pred_check_branch
      %65 = sbr.rel (0) target = $region25
    $region24: #{tpu_custom_call.1} parent=1 // pred_region
      %66 = dma.done [#allocation3], 2048
    $region25: #{tpu_custom_call.1} parent=1 // pred_fallthru
      _
    // Predicated region
    $region26: #{tpu_custom_call.1} parent=1 // pred_check
      _
    $region27: #{tpu_custom_call.1} parent=1 // pred_check_branch
      %68 = sbr.rel (0) target = $region29
    $region28: #{tpu_custom_call.1} parent=1 // pred_region
      %69 = dma.done [#allocation6], 2048
    $region29: #{tpu_custom_call.1} parent=1 // pred_fallthru
      _
    // Predicated region
    $region30: #{tpu_custom_call.1} parent=1 // pred_check
      _
    $region31: #{tpu_custom_call.1} parent=1 // pred_check_branch
      %71 = sbr.rel (0) target = $region33
    $region32: #{tpu_custom_call.1} parent=1 // pred_region
      %72 = dma.done [#allocation6], 16384
    $region33: #{tpu_custom_call.1} parent=1 // pred_fallthru
      _
    // Predicated region
    $region34: #{tpu_custom_call.1} parent=1 // pred_check
      _
    $region35: #{tpu_custom_call.1} parent=1 // pred_check_branch
      %74 = sbr.rel (0) target = $region37
    $region36: #{tpu_custom_call.1} parent=1 // pred_region
      %75 = dma.done [#allocation9], 16384
    $region37: #{tpu_custom_call.1} parent=1 // pred_fallthru
      _
    %v77 = vld [vmem:[#allocation2] sm:$0xff]
    %v78 = vld [vmem:[#allocation2 + $0x8] sm:$0xff]
    %v79 = vld [vmem:[#allocation2 + $0x10] sm:$0xff]
    %v80 = vld [vmem:[#allocation2 + $0x18] sm:$0xff]
    %v81 = vld [vmem:[#allocation2 + $0x20] sm:$0xff]
    %v82 = vld [vmem:[#allocation2 + $0x28] sm:$0xff]
    %v83 = vld [vmem:[#allocation2 + $0x30] sm:$0xff]
    %v84 = vld [vmem:[#allocation2 + $0x38] sm:$0xff]
    %v85 = vld [vmem:[#allocation2 + $0x40] sm:$0xff]
    %v86 = vld [vmem:[#allocation2 + $0x48] sm:$0xff]
    %v87 = vld [vmem:[#allocation2 + $0x50] sm:$0xff]
    %v88 = vld [vmem:[#allocation2 + $0x58] sm:$0xff]
    %v89 = vld [vmem:[#allocation2 + $0x60] sm:$0xff]
    %v90 = vld [vmem:[#allocation2 + $0x68] sm:$0xff]
    %v91 = vld [vmem:[#allocation2 + $0x70] sm:$0xff]
    %v92 = vld [vmem:[#allocation2 + $0x78] sm:$0xff]
    %v93 = vld [vmem:[#allocation7] sm:$0xf]
    %v94 = vld [vmem:[#allocation7 + $0x4] sm:$0xf]
    %v95 = vld [vmem:[#allocation7 + $0x8] sm:$0xf]
    %v96 = vld [vmem:[#allocation7 + $0xc] sm:$0xf]
    %v97 = vld [vmem:[#allocation7 + $0x10] sm:$0xf]
    %v98 = vld [vmem:[#allocation7 + $0x14] sm:$0xf]
    %v99 = vld [vmem:[#allocation7 + $0x18] sm:$0xf]
    %v100 = vld [vmem:[#allocation7 + $0x1c] sm:$0xf]
    %v101 = vld [vmem:[#allocation7 + $0x20] sm:$0xf]
    %v102 = vld [vmem:[#allocation7 + $0x24] sm:$0xf]
    %v103 = vld [vmem:[#allocation7 + $0x28] sm:$0xf]
    %v104 = vld [vmem:[#allocation7 + $0x2c] sm:$0xf]
    %v105 = vld [vmem:[#allocation7 + $0x30] sm:$0xf]
    %v106 = vld [vmem:[#allocation7 + $0x34] sm:$0xf]
    %v107 = vld [vmem:[#allocation7 + $0x38] sm:$0xf]
    %v108 = vld [vmem:[#allocation7 + $0x3c] sm:$0xf]
    %v109 = vld [vmem:[#allocation7 + $0x40] sm:$0xf]
    %v110 = vld [vmem:[#allocation7 + $0x44] sm:$0xf]
    %v111 = vld [vmem:[#allocation7 + $0x48] sm:$0xf]
    %v112 = vld [vmem:[#allocation7 + $0x4c] sm:$0xf]
    %v113 = vld [vmem:[#allocation7 + $0x50] sm:$0xf]
    %v114 = vld [vmem:[#allocation7 + $0x54] sm:$0xf]
    %v115 = vld [vmem:[#allocation7 + $0x58] sm:$0xf]
    %v116 = vld [vmem:[#allocation7 + $0x5c] sm:$0xf]
    %v117 = vld [vmem:[#allocation7 + $0x60] sm:$0xf]
    %v118 = vld [vmem:[#allocation7 + $0x64] sm:$0xf]
    %v119 = vld [vmem:[#allocation7 + $0x68] sm:$0xf]
    %v120 = vld [vmem:[#allocation7 + $0x6c] sm:$0xf]
    %v121 = vld [vmem:[#allocation7 + $0x70] sm:$0xf]
    %v122 = vld [vmem:[#allocation7 + $0x74] sm:$0xf]
    %v123 = vld [vmem:[#allocation7 + $0x78] sm:$0xf]
    %v124 = vld [vmem:[#allocation7 + $0x7c] sm:$0xf]
    %v125 = vld [vmem:[#allocation7 + $0x80] sm:$0xf]
    %v126 = vld [vmem:[#allocation7 + $0x84] sm:$0xf]
    %v127 = vld [vmem:[#allocation7 + $0x88] sm:$0xf]
    %v128 = vld [vmem:[#allocation7 + $0x8c] sm:$0xf]
    %v129 = vld [vmem:[#allocation7 + $0x90] sm:$0xf]
    %v130 = vld [vmem:[#allocation7 + $0x94] sm:$0xf]
    %v131 = vld [vmem:[#allocation7 + $0x98] sm:$0xf]
    %v132 = vld [vmem:[#allocation7 + $0x9c] sm:$0xf]
    %v133 = vld [vmem:[#allocation7 + $0xa0] sm:$0xf]
    %v134 = vld [vmem:[#allocation7 + $0xa4] sm:$0xf]
    %v135 = vld [vmem:[#allocation7 + $0xa8] sm:$0xf]
    %v136 = vld [vmem:[#allocation7 + $0xac] sm:$0xf]
    %v137 = vld [vmem:[#allocation7 + $0xb0] sm:$0xf]
    %v138 = vld [vmem:[#allocation7 + $0xb4] sm:$0xf]
    %v139 = vld [vmem:[#allocation7 + $0xb8] sm:$0xf]
    %v140 = vld [vmem:[#allocation7 + $0xbc] sm:$0xf]
    %v141 = vld [vmem:[#allocation7 + $0xc0] sm:$0xf]
    %v142 = vld [vmem:[#allocation7 + $0xc4] sm:$0xf]
    %v143 = vld [vmem:[#allocation7 + $0xc8] sm:$0xf]
    %v144 = vld [vmem:[#allocation7 + $0xcc] sm:$0xf]
    %v145 = vld [vmem:[#allocation7 + $0xd0] sm:$0xf]
    %v146 = vld [vmem:[#allocation7 + $0xd4] sm:$0xf]
    %v147 = vld [vmem:[#allocation7 + $0xd8] sm:$0xf]
    %v148 = vld [vmem:[#allocation7 + $0xdc] sm:$0xf]
    %v149 = vld [vmem:[#allocation7 + $0xe0] sm:$0xf]
    %v150 = vld [vmem:[#allocation7 + $0xe4] sm:$0xf]
    %v151 = vld [vmem:[#allocation7 + $0xe8] sm:$0xf]
    %v152 = vld [vmem:[#allocation7 + $0xec] sm:$0xf]
    %v153 = vld [vmem:[#allocation7 + $0xf0] sm:$0xf]
    %v154 = vld [vmem:[#allocation7 + $0xf4] sm:$0xf]
    %v155 = vld [vmem:[#allocation7 + $0xf8] sm:$0xf]
    %v156 = vld [vmem:[#allocation7 + $0xfc] sm:$0xf]
    %v157 = vld [vmem:[#allocation7 + $0x100] sm:$0xf]
    %v158 = vld [vmem:[#allocation7 + $0x104] sm:$0xf]
    %v159 = vld [vmem:[#allocation7 + $0x108] sm:$0xf]
    %v160 = vld [vmem:[#allocation7 + $0x10c] sm:$0xf]
    %v161 = vld [vmem:[#allocation7 + $0x110] sm:$0xf]
    %v162 = vld [vmem:[#allocation7 + $0x114] sm:$0xf]
    %v163 = vld [vmem:[#allocation7 + $0x118] sm:$0xf]
    %v164 = vld [vmem:[#allocation7 + $0x11c] sm:$0xf]
    %v165 = vld [vmem:[#allocation7 + $0x120] sm:$0xf]
    %v166 = vld [vmem:[#allocation7 + $0x124] sm:$0xf]
    %v167 = vld [vmem:[#allocation7 + $0x128] sm:$0xf]
    %v168 = vld [vmem:[#allocation7 + $0x12c] sm:$0xf]
    %v169 = vld [vmem:[#allocation7 + $0x130] sm:$0xf]
    %v170 = vld [vmem:[#allocation7 + $0x134] sm:$0xf]
    %v171 = vld [vmem:[#allocation7 + $0x138] sm:$0xf]
    %v172 = vld [vmem:[#allocation7 + $0x13c] sm:$0xf]
    %v173 = vld [vmem:[#allocation7 + $0x140] sm:$0xf]
    %v174 = vld [vmem:[#allocation7 + $0x144] sm:$0xf]
    %v175 = vld [vmem:[#allocation7 + $0x148] sm:$0xf]
    %v176 = vld [vmem:[#allocation7 + $0x14c] sm:$0xf]
    %v177 = vld [vmem:[#allocation7 + $0x150] sm:$0xf]
    %v178 = vld [vmem:[#allocation7 + $0x154] sm:$0xf]
    %v179 = vld [vmem:[#allocation7 + $0x158] sm:$0xf]
    %v180 = vld [vmem:[#allocation7 + $0x15c] sm:$0xf]
    %v181 = vld [vmem:[#allocation7 + $0x160] sm:$0xf]
    %v182 = vld [vmem:[#allocation7 + $0x164] sm:$0xf]
    %v183 = vld [vmem:[#allocation7 + $0x168] sm:$0xf]
    %v184 = vld [vmem:[#allocation7 + $0x16c] sm:$0xf]
    %v185 = vld [vmem:[#allocation7 + $0x170] sm:$0xf]
    %v186 = vld [vmem:[#allocation7 + $0x174] sm:$0xf]
    %v187 = vld [vmem:[#allocation7 + $0x178] sm:$0xf]
    %v188 = vld [vmem:[#allocation7 + $0x17c] sm:$0xf]
    %v189 = vld [vmem:[#allocation7 + $0x180] sm:$0xf]
    %v190 = vld [vmem:[#allocation7 + $0x184] sm:$0xf]
    %v191 = vld [vmem:[#allocation7 + $0x188] sm:$0xf]
    %v192 = vld [vmem:[#allocation7 + $0x18c] sm:$0xf]
    %v193 = vld [vmem:[#allocation7 + $0x190] sm:$0xf]
    %v194 = vld [vmem:[#allocation7 + $0x194] sm:$0xf]
    %v195 = vld [vmem:[#allocation7 + $0x198] sm:$0xf]
    %v196 = vld [vmem:[#allocation7 + $0x19c] sm:$0xf]
    %v197 = vld [vmem:[#allocation7 + $0x1a0] sm:$0xf]
    %v198 = vld [vmem:[#allocation7 + $0x1a4] sm:$0xf]
    %v199 = vld [vmem:[#allocation7 + $0x1a8] sm:$0xf]
    %v200 = vld [vmem:[#allocation7 + $0x1ac] sm:$0xf]
    %v201 = vld [vmem:[#allocation7 + $0x1b0] sm:$0xf]
    %v202 = vld [vmem:[#allocation7 + $0x1b4] sm:$0xf]
    %v203 = vld [vmem:[#allocation7 + $0x1b8] sm:$0xf]
    %v204 = vld [vmem:[#allocation7 + $0x1bc] sm:$0xf]
    %v205 = vld [vmem:[#allocation7 + $0x1c0] sm:$0xf]
    %v206 = vld [vmem:[#allocation7 + $0x1c4] sm:$0xf]
    %v207 = vld [vmem:[#allocation7 + $0x1c8] sm:$0xf]
    %v208 = vld [vmem:[#allocation7 + $0x1cc] sm:$0xf]
    %v209 = vld [vmem:[#allocation7 + $0x1d0] sm:$0xf]
    %v210 = vld [vmem:[#allocation7 + $0x1d4] sm:$0xf]
    %v211 = vld [vmem:[#allocation7 + $0x1d8] sm:$0xf]
    %v212 = vld [vmem:[#allocation7 + $0x1dc] sm:$0xf]
    %v213 = vld [vmem:[#allocation7 + $0x1e0] sm:$0xf]
    %v214 = vld [vmem:[#allocation7 + $0x1e4] sm:$0xf]
    %v215 = vld [vmem:[#allocation7 + $0x1e8] sm:$0xf]
    %v216 = vld [vmem:[#allocation7 + $0x1ec] sm:$0xf]
    %v217 = vld [vmem:[#allocation7 + $0x1f0] sm:$0xf]
    %v218 = vld [vmem:[#allocation7 + $0x1f4] sm:$0xf]
    %v219 = vld [vmem:[#allocation7 + $0x1f8] sm:$0xf]
    %v220 = vld [vmem:[#allocation7 + $0x1fc] sm:$0xf]
    %v221 = vld [vmem:[#allocation7 + $0x200] sm:$0xf]
    %v222 = vld [vmem:[#allocation7 + $0x204] sm:$0xf]
    %v223 = vld [vmem:[#allocation7 + $0x208] sm:$0xf]
    %v224 = vld [vmem:[#allocation7 + $0x20c] sm:$0xf]
    %v225 = vld [vmem:[#allocation7 + $0x210] sm:$0xf]
    %v226 = vld [vmem:[#allocation7 + $0x214] sm:$0xf]
    %v227 = vld [vmem:[#allocation7 + $0x218] sm:$0xf]
    %v228 = vld [vmem:[#allocation7 + $0x21c] sm:$0xf]
    %v229 = vld [vmem:[#allocation7 + $0x220] sm:$0xf]
    %v230 = vld [vmem:[#allocation7 + $0x224] sm:$0xf]
    %v231 = vld [vmem:[#allocation7 + $0x228] sm:$0xf]
    %v232 = vld [vmem:[#allocation7 + $0x22c] sm:$0xf]
    %v233 = vld [vmem:[#allocation7 + $0x230] sm:$0xf]
    %v234 = vld [vmem:[#allocation7 + $0x234] sm:$0xf]
    %v235 = vld [vmem:[#allocation7 + $0x238] sm:$0xf]
    %v236 = vld [vmem:[#allocation7 + $0x23c] sm:$0xf]
    %v237 = vld [vmem:[#allocation7 + $0x240] sm:$0xf]
    %v238 = vld [vmem:[#allocation7 + $0x244] sm:$0xf]
    %v239 = vld [vmem:[#allocation7 + $0x248] sm:$0xf]
    %v240 = vld [vmem:[#allocation7 + $0x24c] sm:$0xf]
    %v241 = vld [vmem:[#allocation7 + $0x250] sm:$0xf]
    %v242 = vld [vmem:[#allocation7 + $0x254] sm:$0xf]
    %v243 = vld [vmem:[#allocation7 + $0x258] sm:$0xf]
    %v244 = vld [vmem:[#allocation7 + $0x25c] sm:$0xf]
    %v245 = vld [vmem:[#allocation7 + $0x260] sm:$0xf]
    %v246 = vld [vmem:[#allocation7 + $0x264] sm:$0xf]
    %v247 = vld [vmem:[#allocation7 + $0x268] sm:$0xf]
    %v248 = vld [vmem:[#allocation7 + $0x26c] sm:$0xf]
    %v249 = vld [vmem:[#allocation7 + $0x270] sm:$0xf]
    %v250 = vld [vmem:[#allocation7 + $0x274] sm:$0xf]
    %v251 = vld [vmem:[#allocation7 + $0x278] sm:$0xf]
    %v252 = vld [vmem:[#allocation7 + $0x27c] sm:$0xf]
    %v253 = vld [vmem:[#allocation7 + $0x280] sm:$0xf]
    %v254 = vld [vmem:[#allocation7 + $0x284] sm:$0xf]
    %v255 = vld [vmem:[#allocation7 + $0x288] sm:$0xf]
    %v256 = vld [vmem:[#allocation7 + $0x28c] sm:$0xf]
    %v257 = vld [vmem:[#allocation7 + $0x290] sm:$0xf]
    %v258 = vld [vmem:[#allocation7 + $0x294] sm:$0xf]
    %v259 = vld [vmem:[#allocation7 + $0x298] sm:$0xf]
    %v260 = vld [vmem:[#allocation7 + $0x29c] sm:$0xf]
    %v261 = vld [vmem:[#allocation7 + $0x2a0] sm:$0xf]
    %v262 = vld [vmem:[#allocation7 + $0x2a4] sm:$0xf]
    %v263 = vld [vmem:[#allocation7 + $0x2a8] sm:$0xf]
    %v264 = vld [vmem:[#allocation7 + $0x2ac] sm:$0xf]
    %v265 = vld [vmem:[#allocation7 + $0x2b0] sm:$0xf]
    %v266 = vld [vmem:[#allocation7 + $0x2b4] sm:$0xf]
    %v267 = vld [vmem:[#allocation7 + $0x2b8] sm:$0xf]
    %v268 = vld [vmem:[#allocation7 + $0x2bc] sm:$0xf]
    %v269 = vld [vmem:[#allocation7 + $0x2c0] sm:$0xf]
    %v270 = vld [vmem:[#allocation7 + $0x2c4] sm:$0xf]
    %v271 = vld [vmem:[#allocation7 + $0x2c8] sm:$0xf]
    %v272 = vld [vmem:[#allocation7 + $0x2cc] sm:$0xf]
    %v273 = vld [vmem:[#allocation7 + $0x2d0] sm:$0xf]
    %v274 = vld [vmem:[#allocation7 + $0x2d4] sm:$0xf]
    %v275 = vld [vmem:[#allocation7 + $0x2d8] sm:$0xf]
    %v276 = vld [vmem:[#allocation7 + $0x2dc] sm:$0xf]
    %v277 = vld [vmem:[#allocation7 + $0x2e0] sm:$0xf]
    %v278 = vld [vmem:[#allocation7 + $0x2e4] sm:$0xf]
    %v279 = vld [vmem:[#allocation7 + $0x2e8] sm:$0xf]
    %v280 = vld [vmem:[#allocation7 + $0x2ec] sm:$0xf]
    %v281 = vld [vmem:[#allocation7 + $0x2f0] sm:$0xf]
    %v282 = vld [vmem:[#allocation7 + $0x2f4] sm:$0xf]
    %v283 = vld [vmem:[#allocation7 + $0x2f8] sm:$0xf]
    %v284 = vld [vmem:[#allocation7 + $0x2fc] sm:$0xf]
    %v285 = vld [vmem:[#allocation7 + $0x300] sm:$0xf]
    %v286 = vld [vmem:[#allocation7 + $0x304] sm:$0xf]
    %v287 = vld [vmem:[#allocation7 + $0x308] sm:$0xf]
    %v288 = vld [vmem:[#allocation7 + $0x30c] sm:$0xf]
    %v289 = vld [vmem:[#allocation7 + $0x310] sm:$0xf]
    %v290 = vld [vmem:[#allocation7 + $0x314] sm:$0xf]
    %v291 = vld [vmem:[#allocation7 + $0x318] sm:$0xf]
    %v292 = vld [vmem:[#allocation7 + $0x31c] sm:$0xf]
    %v293 = vld [vmem:[#allocation7 + $0x320] sm:$0xf]
    %v294 = vld [vmem:[#allocation7 + $0x324] sm:$0xf]
    %v295 = vld [vmem:[#allocation7 + $0x328] sm:$0xf]
    %v296 = vld [vmem:[#allocation7 + $0x32c] sm:$0xf]
    %v297 = vld [vmem:[#allocation7 + $0x330] sm:$0xf]
    %v298 = vld [vmem:[#allocation7 + $0x334] sm:$0xf]
    %v299 = vld [vmem:[#allocation7 + $0x338] sm:$0xf]
    %v300 = vld [vmem:[#allocation7 + $0x33c] sm:$0xf]
    %v301 = vld [vmem:[#allocation7 + $0x340] sm:$0xf]
    %v302 = vld [vmem:[#allocation7 + $0x344] sm:$0xf]
    %v303 = vld [vmem:[#allocation7 + $0x348] sm:$0xf]
    %v304 = vld [vmem:[#allocation7 + $0x34c] sm:$0xf]
    %v305 = vld [vmem:[#allocation7 + $0x350] sm:$0xf]
    %v306 = vld [vmem:[#allocation7 + $0x354] sm:$0xf]
    %v307 = vld [vmem:[#allocation7 + $0x358] sm:$0xf]
    %v308 = vld [vmem:[#allocation7 + $0x35c] sm:$0xf]
    %v309 = vld [vmem:[#allocation7 + $0x360] sm:$0xf]
    %v310 = vld [vmem:[#allocation7 + $0x364] sm:$0xf]
    %v311 = vld [vmem:[#allocation7 + $0x368] sm:$0xf]
    %v312 = vld [vmem:[#allocation7 + $0x36c] sm:$0xf]
    %v313 = vld [vmem:[#allocation7 + $0x370] sm:$0xf]
    %v314 = vld [vmem:[#allocation7 + $0x374] sm:$0xf]
    %v315 = vld [vmem:[#allocation7 + $0x378] sm:$0xf]
    %v316 = vld [vmem:[#allocation7 + $0x37c] sm:$0xf]
    %v317 = vld [vmem:[#allocation7 + $0x380] sm:$0xf]
    %v318 = vld [vmem:[#allocation7 + $0x384] sm:$0xf]
    %v319 = vld [vmem:[#allocation7 + $0x388] sm:$0xf]
    %v320 = vld [vmem:[#allocation7 + $0x38c] sm:$0xf]
    %v321 = vld [vmem:[#allocation7 + $0x390] sm:$0xf]
    %v322 = vld [vmem:[#allocation7 + $0x394] sm:$0xf]
    %v323 = vld [vmem:[#allocation7 + $0x398] sm:$0xf]
    %v324 = vld [vmem:[#allocation7 + $0x39c] sm:$0xf]
    %v325 = vld [vmem:[#allocation7 + $0x3a0] sm:$0xf]
    %v326 = vld [vmem:[#allocation7 + $0x3a4] sm:$0xf]
    %v327 = vld [vmem:[#allocation7 + $0x3a8] sm:$0xf]
    %v328 = vld [vmem:[#allocation7 + $0x3ac] sm:$0xf]
    %v329 = vld [vmem:[#allocation7 + $0x3b0] sm:$0xf]
    %v330 = vld [vmem:[#allocation7 + $0x3b4] sm:$0xf]
    %v331 = vld [vmem:[#allocation7 + $0x3b8] sm:$0xf]
    %v332 = vld [vmem:[#allocation7 + $0x3bc] sm:$0xf]
    %v333 = vld [vmem:[#allocation7 + $0x3c0] sm:$0xf]
    %v334 = vld [vmem:[#allocation7 + $0x3c4] sm:$0xf]
    %v335 = vld [vmem:[#allocation7 + $0x3c8] sm:$0xf]
    %v336 = vld [vmem:[#allocation7 + $0x3cc] sm:$0xf]
    %v337 = vld [vmem:[#allocation7 + $0x3d0] sm:$0xf]
    %v338 = vld [vmem:[#allocation7 + $0x3d4] sm:$0xf]
    %v339 = vld [vmem:[#allocation7 + $0x3d8] sm:$0xf]
    %v340 = vld [vmem:[#allocation7 + $0x3dc] sm:$0xf]
    %v341 = vld [vmem:[#allocation7 + $0x3e0] sm:$0xf]
    %v342 = vld [vmem:[#allocation7 + $0x3e4] sm:$0xf]
    %v343 = vld [vmem:[#allocation7 + $0x3e8] sm:$0xf]
    %v344 = vld [vmem:[#allocation7 + $0x3ec] sm:$0xf]
    %v345 = vld [vmem:[#allocation7 + $0x3f0] sm:$0xf]
    %v346 = vld [vmem:[#allocation7 + $0x3f4] sm:$0xf]
    %v347 = vld [vmem:[#allocation7 + $0x3f8] sm:$0xf]
    %v348 = vld [vmem:[#allocation7 + $0x3fc] sm:$0xf]
    %v349 = vld [vmem:[#allocation5] sm:$0xff]
    %v350 = vld [vmem:[#allocation5 + $0x8] sm:$0xff]
    %v351 = vld [vmem:[#allocation5 + $0x10] sm:$0xff]
    %v352 = vld [vmem:[#allocation5 + $0x18] sm:$0xff]
    %v353 = vld [vmem:[#allocation5 + $0x20] sm:$0xff]
    %v354 = vld [vmem:[#allocation5 + $0x28] sm:$0xff]
    %v355 = vld [vmem:[#allocation5 + $0x30] sm:$0xff]
    %v356 = vld [vmem:[#allocation5 + $0x38] sm:$0xff]
    %v357 = vld [vmem:[#allocation5 + $0x40] sm:$0xff]
    %v358 = vld [vmem:[#allocation5 + $0x48] sm:$0xff]
    %v359 = vld [vmem:[#allocation5 + $0x50] sm:$0xff]
    %v360 = vld [vmem:[#allocation5 + $0x58] sm:$0xff]
    %v361 = vld [vmem:[#allocation5 + $0x60] sm:$0xff]
    %v362 = vld [vmem:[#allocation5 + $0x68] sm:$0xff]
    %v363 = vld [vmem:[#allocation5 + $0x70] sm:$0xff]
    %v364 = vld [vmem:[#allocation5 + $0x78] sm:$0xff]
    %v365 = vld [vmem:[#allocation8] sm:$0xf]
    %v366 = vld [vmem:[#allocation8 + $0x4] sm:$0xf]
    %v367 = vld [vmem:[#allocation8 + $0x8] sm:$0xf]
    %v368 = vld [vmem:[#allocation8 + $0xc] sm:$0xf]
    %v369 = vld [vmem:[#allocation8 + $0x10] sm:$0xf]
    %v370 = vld [vmem:[#allocation8 + $0x14] sm:$0xf]
    %v371 = vld [vmem:[#allocation8 + $0x18] sm:$0xf]
    %v372 = vld [vmem:[#allocation8 + $0x1c] sm:$0xf]
    %v373 = vld [vmem:[#allocation8 + $0x20] sm:$0xf]
    %v374 = vld [vmem:[#allocation8 + $0x24] sm:$0xf]
    %v375 = vld [vmem:[#allocation8 + $0x28] sm:$0xf]
    %v376 = vld [vmem:[#allocation8 + $0x2c] sm:$0xf]
    %v377 = vld [vmem:[#allocation8 + $0x30] sm:$0xf]
    %v378 = vld [vmem:[#allocation8 + $0x34] sm:$0xf]
    %v379 = vld [vmem:[#allocation8 + $0x38] sm:$0xf]
    %v380 = vld [vmem:[#allocation8 + $0x3c] sm:$0xf]
    %v381 = vld [vmem:[#allocation8 + $0x40] sm:$0xf]
    %v382 = vld [vmem:[#allocation8 + $0x44] sm:$0xf]
    %v383 = vld [vmem:[#allocation8 + $0x48] sm:$0xf]
    %v384 = vld [vmem:[#allocation8 + $0x4c] sm:$0xf]
    %v385 = vld [vmem:[#allocation8 + $0x50] sm:$0xf]
    %v386 = vld [vmem:[#allocation8 + $0x54] sm:$0xf]
    %v387 = vld [vmem:[#allocation8 + $0x58] sm:$0xf]
    %v388 = vld [vmem:[#allocation8 + $0x5c] sm:$0xf]
    %v389 = vld [vmem:[#allocation8 + $0x60] sm:$0xf]
    %v390 = vld [vmem:[#allocation8 + $0x64] sm:$0xf]
    %v391 = vld [vmem:[#allocation8 + $0x68] sm:$0xf]
    %v392 = vld [vmem:[#allocation8 + $0x6c] sm:$0xf]
    %v393 = vld [vmem:[#allocation8 + $0x70] sm:$0xf]
    %v394 = vld [vmem:[#allocation8 + $0x74] sm:$0xf]
    %v395 = vld [vmem:[#allocation8 + $0x78] sm:$0xf]
    %v396 = vld [vmem:[#allocation8 + $0x7c] sm:$0xf]
    %v397 = vld [vmem:[#allocation8 + $0x80] sm:$0xf]
    %v398 = vld [vmem:[#allocation8 + $0x84] sm:$0xf]
    %v399 = vld [vmem:[#allocation8 + $0x88] sm:$0xf]
    %v400 = vld [vmem:[#allocation8 + $0x8c] sm:$0xf]
    %v401 = vld [vmem:[#allocation8 + $0x90] sm:$0xf]
    %v402 = vld [vmem:[#allocation8 + $0x94] sm:$0xf]
    %v403 = vld [vmem:[#allocation8 + $0x98] sm:$0xf]
    %v404 = vld [vmem:[#allocation8 + $0x9c] sm:$0xf]
    %v405 = vld [vmem:[#allocation8 + $0xa0] sm:$0xf]
    %v406 = vld [vmem:[#allocation8 + $0xa4] sm:$0xf]
    %v407 = vld [vmem:[#allocation8 + $0xa8] sm:$0xf]
    %v408 = vld [vmem:[#allocation8 + $0xac] sm:$0xf]
    %v409 = vld [vmem:[#allocation8 + $0xb0] sm:$0xf]
    %v410 = vld [vmem:[#allocation8 + $0xb4] sm:$0xf]
    %v411 = vld [vmem:[#allocation8 + $0xb8] sm:$0xf]
    %v412 = vld [vmem:[#allocation8 + $0xbc] sm:$0xf]
    %v413 = vld [vmem:[#allocation8 + $0xc0] sm:$0xf]
    %v414 = vld [vmem:[#allocation8 + $0xc4] sm:$0xf]
    %v415 = vld [vmem:[#allocation8 + $0xc8] sm:$0xf]
    %v416 = vld [vmem:[#allocation8 + $0xcc] sm:$0xf]
    %v417 = vld [vmem:[#allocation8 + $0xd0] sm:$0xf]
    %v418 = vld [vmem:[#allocation8 + $0xd4] sm:$0xf]
    %v419 = vld [vmem:[#allocation8 + $0xd8] sm:$0xf]
    %v420 = vld [vmem:[#allocation8 + $0xdc] sm:$0xf]
    %v421 = vld [vmem:[#allocation8 + $0xe0] sm:$0xf]
    %v422 = vld [vmem:[#allocation8 + $0xe4] sm:$0xf]
    %v423 = vld [vmem:[#allocation8 + $0xe8] sm:$0xf]
    %v424 = vld [vmem:[#allocation8 + $0xec] sm:$0xf]
    %v425 = vld [vmem:[#allocation8 + $0xf0] sm:$0xf]
    %v426 = vld [vmem:[#allocation8 + $0xf4] sm:$0xf]
    %v427 = vld [vmem:[#allocation8 + $0xf8] sm:$0xf]
    %v428 = vld [vmem:[#allocation8 + $0xfc] sm:$0xf]
    %v429 = vld [vmem:[#allocation8 + $0x100] sm:$0xf]
    %v430 = vld [vmem:[#allocation8 + $0x104] sm:$0xf]
    %v431 = vld [vmem:[#allocation8 + $0x108] sm:$0xf]
    %v432 = vld [vmem:[#allocation8 + $0x10c] sm:$0xf]
    %v433 = vld [vmem:[#allocation8 + $0x110] sm:$0xf]
    %v434 = vld [vmem:[#allocation8 + $0x114] sm:$0xf]
    %v435 = vld [vmem:[#allocation8 + $0x118] sm:$0xf]
    %v436 = vld [vmem:[#allocation8 + $0x11c] sm:$0xf]
    %v437 = vld [vmem:[#allocation8 + $0x120] sm:$0xf]
    %v438 = vld [vmem:[#allocation8 + $0x124] sm:$0xf]
    %v439 = vld [vmem:[#allocation8 + $0x128] sm:$0xf]
    %v440 = vld [vmem:[#allocation8 + $0x12c] sm:$0xf]
    %v441 = vld [vmem:[#allocation8 + $0x130] sm:$0xf]
    %v442 = vld [vmem:[#allocation8 + $0x134] sm:$0xf]
    %v443 = vld [vmem:[#allocation8 + $0x138] sm:$0xf]
    %v444 = vld [vmem:[#allocation8 + $0x13c] sm:$0xf]
    %v445 = vld [vmem:[#allocation8 + $0x140] sm:$0xf]
    %v446 = vld [vmem:[#allocation8 + $0x144] sm:$0xf]
    %v447 = vld [vmem:[#allocation8 + $0x148] sm:$0xf]
    %v448 = vld [vmem:[#allocation8 + $0x14c] sm:$0xf]
    %v449 = vld [vmem:[#allocation8 + $0x150] sm:$0xf]
    %v450 = vld [vmem:[#allocation8 + $0x154] sm:$0xf]
    %v451 = vld [vmem:[#allocation8 + $0x158] sm:$0xf]
    %v452 = vld [vmem:[#allocation8 + $0x15c] sm:$0xf]
    %v453 = vld [vmem:[#allocation8 + $0x160] sm:$0xf]
    %v454 = vld [vmem:[#allocation8 + $0x164] sm:$0xf]
    %v455 = vld [vmem:[#allocation8 + $0x168] sm:$0xf]
    %v456 = vld [vmem:[#allocation8 + $0x16c] sm:$0xf]
    %v457 = vld [vmem:[#allocation8 + $0x170] sm:$0xf]
    %v458 = vld [vmem:[#allocation8 + $0x174] sm:$0xf]
    %v459 = vld [vmem:[#allocation8 + $0x178] sm:$0xf]
    %v460 = vld [vmem:[#allocation8 + $0x17c] sm:$0xf]
    %v461 = vld [vmem:[#allocation8 + $0x180] sm:$0xf]
    %v462 = vld [vmem:[#allocation8 + $0x184] sm:$0xf]
    %v463 = vld [vmem:[#allocation8 + $0x188] sm:$0xf]
    %v464 = vld [vmem:[#allocation8 + $0x18c] sm:$0xf]
    %v465 = vld [vmem:[#allocation8 + $0x190] sm:$0xf]
    %v466 = vld [vmem:[#allocation8 + $0x194] sm:$0xf]
    %v467 = vld [vmem:[#allocation8 + $0x198] sm:$0xf]
    %v468 = vld [vmem:[#allocation8 + $0x19c] sm:$0xf]
    %v469 = vld [vmem:[#allocation8 + $0x1a0] sm:$0xf]
    %v470 = vld [vmem:[#allocation8 + $0x1a4] sm:$0xf]
    %v471 = vld [vmem:[#allocation8 + $0x1a8] sm:$0xf]
    %v472 = vld [vmem:[#allocation8 + $0x1ac] sm:$0xf]
    %v473 = vld [vmem:[#allocation8 + $0x1b0] sm:$0xf]
    %v474 = vld [vmem:[#allocation8 + $0x1b4] sm:$0xf]
    %v475 = vld [vmem:[#allocation8 + $0x1b8] sm:$0xf]
    %v476 = vld [vmem:[#allocation8 + $0x1bc] sm:$0xf]
    %v477 = vld [vmem:[#allocation8 + $0x1c0] sm:$0xf]
    %v478 = vld [vmem:[#allocation8 + $0x1c4] sm:$0xf]
    %v479 = vld [vmem:[#allocation8 + $0x1c8] sm:$0xf]
    %v480 = vld [vmem:[#allocation8 + $0x1cc] sm:$0xf]
    %v481 = vld [vmem:[#allocation8 + $0x1d0] sm:$0xf]
    %v482 = vld [vmem:[#allocation8 + $0x1d4] sm:$0xf]
    %v483 = vld [vmem:[#allocation8 + $0x1d8] sm:$0xf]
    %v484 = vld [vmem:[#allocation8 + $0x1dc] sm:$0xf]
    %v485 = vld [vmem:[#allocation8 + $0x1e0] sm:$0xf]
    %v486 = vld [vmem:[#allocation8 + $0x1e4] sm:$0xf]
    %v487 = vld [vmem:[#allocation8 + $0x1e8] sm:$0xf]
    %v488 = vld [vmem:[#allocation8 + $0x1ec] sm:$0xf]
    %v489 = vld [vmem:[#allocation8 + $0x1f0] sm:$0xf]
    %v490 = vld [vmem:[#allocation8 + $0x1f4] sm:$0xf]
    %v491 = vld [vmem:[#allocation8 + $0x1f8] sm:$0xf]
    %v492 = vld [vmem:[#allocation8 + $0x1fc] sm:$0xf]
    %v493 = vld [vmem:[#allocation8 + $0x200] sm:$0xf]
    %v494 = vld [vmem:[#allocation8 + $0x204] sm:$0xf]
    %v495 = vld [vmem:[#allocation8 + $0x208] sm:$0xf]
    %v496 = vld [vmem:[#allocation8 + $0x20c] sm:$0xf]
    %v497 = vld [vmem:[#allocation8 + $0x210] sm:$0xf]
    %v498 = vld [vmem:[#allocation8 + $0x214] sm:$0xf]
    %v499 = vld [vmem:[#allocation8 + $0x218] sm:$0xf]
    %v500 = vld [vmem:[#allocation8 + $0x21c] sm:$0xf]
    %v501 = vld [vmem:[#allocation8 + $0x220] sm:$0xf]
    %v502 = vld [vmem:[#allocation8 + $0x224] sm:$0xf]
    %v503 = vld [vmem:[#allocation8 + $0x228] sm:$0xf]
    %v504 = vld [vmem:[#allocation8 + $0x22c] sm:$0xf]
    %v505 = vld [vmem:[#allocation8 + $0x230] sm:$0xf]
    %v506 = vld [vmem:[#allocation8 + $0x234] sm:$0xf]
    %v507 = vld [vmem:[#allocation8 + $0x238] sm:$0xf]
    %v508 = vld [vmem:[#allocation8 + $0x23c] sm:$0xf]
    %v509 = vld [vmem:[#allocation8 + $0x240] sm:$0xf]
    %v510 = vld [vmem:[#allocation8 + $0x244] sm:$0xf]
    %v511 = vld [vmem:[#allocation8 + $0x248] sm:$0xf]
    %v512 = vld [vmem:[#allocation8 + $0x24c] sm:$0xf]
    %v513 = vld [vmem:[#allocation8 + $0x250] sm:$0xf]
    %v514 = vld [vmem:[#allocation8 + $0x254] sm:$0xf]
    %v515 = vld [vmem:[#allocation8 + $0x258] sm:$0xf]
    %v516 = vld [vmem:[#allocation8 + $0x25c] sm:$0xf]
    %v517 = vld [vmem:[#allocation8 + $0x260] sm:$0xf]
    %v518 = vld [vmem:[#allocation8 + $0x264] sm:$0xf]
    %v519 = vld [vmem:[#allocation8 + $0x268] sm:$0xf]
    %v520 = vld [vmem:[#allocation8 + $0x26c] sm:$0xf]
    %v521 = vld [vmem:[#allocation8 + $0x270] sm:$0xf]
    %v522 = vld [vmem:[#allocation8 + $0x274] sm:$0xf]
    %v523 = vld [vmem:[#allocation8 + $0x278] sm:$0xf]
    %v524 = vld [vmem:[#allocation8 + $0x27c] sm:$0xf]
    %v525 = vld [vmem:[#allocation8 + $0x280] sm:$0xf]
    %v526 = vld [vmem:[#allocation8 + $0x284] sm:$0xf]
    %v527 = vld [vmem:[#allocation8 + $0x288] sm:$0xf]
    %v528 = vld [vmem:[#allocation8 + $0x28c] sm:$0xf]
    %v529 = vld [vmem:[#allocation8 + $0x290] sm:$0xf]
    %v530 = vld [vmem:[#allocation8 + $0x294] sm:$0xf]
    %v531 = vld [vmem:[#allocation8 + $0x298] sm:$0xf]
    %v532 = vld [vmem:[#allocation8 + $0x29c] sm:$0xf]
    %v533 = vld [vmem:[#allocation8 + $0x2a0] sm:$0xf]
    %v534 = vld [vmem:[#allocation8 + $0x2a4] sm:$0xf]
    %v535 = vld [vmem:[#allocation8 + $0x2a8] sm:$0xf]
    %v536 = vld [vmem:[#allocation8 + $0x2ac] sm:$0xf]
    %v537 = vld [vmem:[#allocation8 + $0x2b0] sm:$0xf]
    %v538 = vld [vmem:[#allocation8 + $0x2b4] sm:$0xf]
    %v539 = vld [vmem:[#allocation8 + $0x2b8] sm:$0xf]
    %v540 = vld [vmem:[#allocation8 + $0x2bc] sm:$0xf]
    %v541 = vld [vmem:[#allocation8 + $0x2c0] sm:$0xf]
    %v542 = vld [vmem:[#allocation8 + $0x2c4] sm:$0xf]
    %v543 = vld [vmem:[#allocation8 + $0x2c8] sm:$0xf]
    %v544 = vld [vmem:[#allocation8 + $0x2cc] sm:$0xf]
    %v545 = vld [vmem:[#allocation8 + $0x2d0] sm:$0xf]
    %v546 = vld [vmem:[#allocation8 + $0x2d4] sm:$0xf]
    %v547 = vld [vmem:[#allocation8 + $0x2d8] sm:$0xf]
    %v548 = vld [vmem:[#allocation8 + $0x2dc] sm:$0xf]
    %v549 = vld [vmem:[#allocation8 + $0x2e0] sm:$0xf]
    %v550 = vld [vmem:[#allocation8 + $0x2e4] sm:$0xf]
    %v551 = vld [vmem:[#allocation8 + $0x2e8] sm:$0xf]
    %v552 = vld [vmem:[#allocation8 + $0x2ec] sm:$0xf]
    %v553 = vld [vmem:[#allocation8 + $0x2f0] sm:$0xf]
    %v554 = vld [vmem:[#allocation8 + $0x2f4] sm:$0xf]
    %v555 = vld [vmem:[#allocation8 + $0x2f8] sm:$0xf]
    %v556 = vld [vmem:[#allocation8 + $0x2fc] sm:$0xf]
    %v557 = vld [vmem:[#allocation8 + $0x300] sm:$0xf]
    %v558 = vld [vmem:[#allocation8 + $0x304] sm:$0xf]
    %v559 = vld [vmem:[#allocation8 + $0x308] sm:$0xf]
    %v560 = vld [vmem:[#allocation8 + $0x30c] sm:$0xf]
    %v561 = vld [vmem:[#allocation8 + $0x310] sm:$0xf]
    %v562 = vld [vmem:[#allocation8 + $0x314] sm:$0xf]
    %v563 = vld [vmem:[#allocation8 + $0x318] sm:$0xf]
    %v564 = vld [vmem:[#allocation8 + $0x31c] sm:$0xf]
    %v565 = vld [vmem:[#allocation8 + $0x320] sm:$0xf]
    %v566 = vld [vmem:[#allocation8 + $0x324] sm:$0xf]
    %v567 = vld [vmem:[#allocation8 + $0x328] sm:$0xf]
    %v568 = vld [vmem:[#allocation8 + $0x32c] sm:$0xf]
    %v569 = vld [vmem:[#allocation8 + $0x330] sm:$0xf]
    %v570 = vld [vmem:[#allocation8 + $0x334] sm:$0xf]
    %v571 = vld [vmem:[#allocation8 + $0x338] sm:$0xf]
    %v572 = vld [vmem:[#allocation8 + $0x33c] sm:$0xf]
    %v573 = vld [vmem:[#allocation8 + $0x340] sm:$0xf]
    %v574 = vld [vmem:[#allocation8 + $0x344] sm:$0xf]
    %v575 = vld [vmem:[#allocation8 + $0x348] sm:$0xf]
    %v576 = vld [vmem:[#allocation8 + $0x34c] sm:$0xf]
    %v577 = vld [vmem:[#allocation8 + $0x350] sm:$0xf]
    %v578 = vld [vmem:[#allocation8 + $0x354] sm:$0xf]
    %v579 = vld [vmem:[#allocation8 + $0x358] sm:$0xf]
    %v580 = vld [vmem:[#allocation8 + $0x35c] sm:$0xf]
    %v581 = vld [vmem:[#allocation8 + $0x360] sm:$0xf]
    %v582 = vld [vmem:[#allocation8 + $0x364] sm:$0xf]
    %v583 = vld [vmem:[#allocation8 + $0x368] sm:$0xf]
    %v584 = vld [vmem:[#allocation8 + $0x36c] sm:$0xf]
    %v585 = vld [vmem:[#allocation8 + $0x370] sm:$0xf]
    %v586 = vld [vmem:[#allocation8 + $0x374] sm:$0xf]
    %v587 = vld [vmem:[#allocation8 + $0x378] sm:$0xf]
    %v588 = vld [vmem:[#allocation8 + $0x37c] sm:$0xf]
    %v589 = vld [vmem:[#allocation8 + $0x380] sm:$0xf]
    %v590 = vld [vmem:[#allocation8 + $0x384] sm:$0xf]
    %v591 = vld [vmem:[#allocation8 + $0x388] sm:$0xf]
    %v592 = vld [vmem:[#allocation8 + $0x38c] sm:$0xf]
    %v593 = vld [vmem:[#allocation8 + $0x390] sm:$0xf]
    %v594 = vld [vmem:[#allocation8 + $0x394] sm:$0xf]
    %v595 = vld [vmem:[#allocation8 + $0x398] sm:$0xf]
    %v596 = vld [vmem:[#allocation8 + $0x39c] sm:$0xf]
    %v597 = vld [vmem:[#allocation8 + $0x3a0] sm:$0xf]
    %v598 = vld [vmem:[#allocation8 + $0x3a4] sm:$0xf]
    %v599 = vld [vmem:[#allocation8 + $0x3a8] sm:$0xf]
    %v600 = vld [vmem:[#allocation8 + $0x3ac] sm:$0xf]
    %v601 = vld [vmem:[#allocation8 + $0x3b0] sm:$0xf]
    %v602 = vld [vmem:[#allocation8 + $0x3b4] sm:$0xf]
    %v603 = vld [vmem:[#allocation8 + $0x3b8] sm:$0xf]
    %v604 = vld [vmem:[#allocation8 + $0x3bc] sm:$0xf]
    %v605 = vld [vmem:[#allocation8 + $0x3c0] sm:$0xf]
    %v606 = vld [vmem:[#allocation8 + $0x3c4] sm:$0xf]
    %v607 = vld [vmem:[#allocation8 + $0x3c8] sm:$0xf]
    %v608 = vld [vmem:[#allocation8 + $0x3cc] sm:$0xf]
    %v609 = vld [vmem:[#allocation8 + $0x3d0] sm:$0xf]
    %v610 = vld [vmem:[#allocation8 + $0x3d4] sm:$0xf]
    %v611 = vld [vmem:[#allocation8 + $0x3d8] sm:$0xf]
    %v612 = vld [vmem:[#allocation8 + $0x3dc] sm:$0xf]
    %v613 = vld [vmem:[#allocation8 + $0x3e0] sm:$0xf]
    %v614 = vld [vmem:[#allocation8 + $0x3e4] sm:$0xf]
    %v615 = vld [vmem:[#allocation8 + $0x3e8] sm:$0xf]
    %v616 = vld [vmem:[#allocation8 + $0x3ec] sm:$0xf]
    %v617 = vld [vmem:[#allocation8 + $0x3f0] sm:$0xf]
    %v618 = vld [vmem:[#allocation8 + $0x3f4] sm:$0xf]
    %v619 = vld [vmem:[#allocation8 + $0x3f8] sm:$0xf]
    %v620 = vld [vmem:[#allocation8 + $0x3fc] sm:$0xf]
    %v637 = vunpack.c.l.b16 %v349
    %v638 = vunpack.c.h.b16 %v349
    %v639 = vunpack.c.l.b16 %v350
    %v640 = vunpack.c.h.b16 %v350
    %v641 = vunpack.c.l.b16 %v351
    %v642 = vunpack.c.h.b16 %v351
    %v643 = vunpack.c.l.b16 %v352
    %v644 = vunpack.c.h.b16 %v352
    %v645 = vunpack.c.l.b16 %v353
    %v646 = vunpack.c.h.b16 %v353
    %v647 = vunpack.c.l.b16 %v354
    %v648 = vunpack.c.h.b16 %v354
    %v649 = vunpack.c.l.b16 %v355
    %v650 = vunpack.c.h.b16 %v355
    %v651 = vunpack.c.l.b16 %v356
    %v652 = vunpack.c.h.b16 %v356
    %v653 = vunpack.c.l.b16 %v357
    %v654 = vunpack.c.h.b16 %v357
    %v655 = vunpack.c.l.b16 %v358
    %v656 = vunpack.c.h.b16 %v358
    %v657 = vunpack.c.l.b16 %v359
    %v658 = vunpack.c.h.b16 %v359
    %v659 = vunpack.c.l.b16 %v360
    %v660 = vunpack.c.h.b16 %v360
    %v661 = vunpack.c.l.b16 %v361
    %v662 = vunpack.c.h.b16 %v361
    %v663 = vunpack.c.l.b16 %v362
    %v664 = vunpack.c.h.b16 %v362
    %v665 = vunpack.c.l.b16 %v363
    %v666 = vunpack.c.h.b16 %v363
    %v667 = vunpack.c.l.b16 %v364
    %v668 = vunpack.c.h.b16 %v364
    %v669 = vpack.c.b16 %v653, %v637
    %v670 = vpack.c.b16 %v654, %v638
    %v671 = vpack.c.b16 %v655, %v639
    %v672 = vpack.c.b16 %v656, %v640
    %v673 = vpack.c.b16 %v657, %v641
    %v674 = vpack.c.b16 %v658, %v642
    %v675 = vpack.c.b16 %v659, %v643
    %v676 = vpack.c.b16 %v660, %v644
    %v677 = vpack.c.b16 %v661, %v645
    %v678 = vpack.c.b16 %v662, %v646
    %v679 = vpack.c.b16 %v663, %v647
    %v680 = vpack.c.b16 %v664, %v648
    %v681 = vpack.c.b16 %v665, %v649
    %v682 = vpack.c.b16 %v666, %v650
    %v683 = vpack.c.b16 %v667, %v651
    %v684 = vpack.c.b16 %v668, %v652
    %v957 = vunpack.c.l.b16 %v365
    %v958 = vunpack.c.l.b16 %v366
    %v959 = vunpack.c.l.b16 %v367
    %v960 = vunpack.c.l.b16 %v368
    %v961 = vunpack.c.l.b16 %v369
    %v962 = vunpack.c.l.b16 %v370
    %v963 = vunpack.c.l.b16 %v371
    %v964 = vunpack.c.l.b16 %v372
    %v965 = vunpack.c.l.b16 %v373
    %v966 = vunpack.c.l.b16 %v374
    %v967 = vunpack.c.l.b16 %v375
    %v968 = vunpack.c.l.b16 %v376
    %v969 = vunpack.c.l.b16 %v377
    %v970 = vunpack.c.l.b16 %v378
    %v971 = vunpack.c.l.b16 %v379
    %v972 = vunpack.c.l.b16 %v380
    %v973 = vunpack.c.l.b16 %v381
    %v974 = vunpack.c.l.b16 %v382
    %v975 = vunpack.c.l.b16 %v383
    %v976 = vunpack.c.l.b16 %v384
    %v977 = vunpack.c.l.b16 %v385
    %v978 = vunpack.c.l.b16 %v386
    %v979 = vunpack.c.l.b16 %v387
    %v980 = vunpack.c.l.b16 %v388
    %v981 = vunpack.c.l.b16 %v389
    %v982 = vunpack.c.l.b16 %v390
    %v983 = vunpack.c.l.b16 %v391
    %v984 = vunpack.c.l.b16 %v392
    %v985 = vunpack.c.l.b16 %v393
    %v986 = vunpack.c.l.b16 %v394
    %v987 = vunpack.c.l.b16 %v395
    %v988 = vunpack.c.l.b16 %v396
    %v989 = vunpack.c.l.b16 %v397
    %v990 = vunpack.c.l.b16 %v398
    %v991 = vunpack.c.l.b16 %v399
    %v992 = vunpack.c.l.b16 %v400
    %v993 = vunpack.c.l.b16 %v401
    %v994 = vunpack.c.l.b16 %v402
    %v995 = vunpack.c.l.b16 %v403
    %v996 = vunpack.c.l.b16 %v404
    %v997 = vunpack.c.l.b16 %v405
    %v998 = vunpack.c.l.b16 %v406
    %v999 = vunpack.c.l.b16 %v407
    %v1000 = vunpack.c.l.b16 %v408
    %v1001 = vunpack.c.l.b16 %v409
    %v1002 = vunpack.c.l.b16 %v410
    %v1003 = vunpack.c.l.b16 %v411
    %v1004 = vunpack.c.l.b16 %v412
    %v1005 = vunpack.c.l.b16 %v413
    %v1006 = vunpack.c.l.b16 %v414
    %v1007 = vunpack.c.l.b16 %v415
    %v1008 = vunpack.c.l.b16 %v416
    %v1009 = vunpack.c.l.b16 %v417
    %v1010 = vunpack.c.l.b16 %v418
    %v1011 = vunpack.c.l.b16 %v419
    %v1012 = vunpack.c.l.b16 %v420
    %v1013 = vunpack.c.l.b16 %v421
    %v1014 = vunpack.c.l.b16 %v422
    %v1015 = vunpack.c.l.b16 %v423
    %v1016 = vunpack.c.l.b16 %v424
    %v1017 = vunpack.c.l.b16 %v425
    %v1018 = vunpack.c.l.b16 %v426
    %v1019 = vunpack.c.l.b16 %v427
    %v1020 = vunpack.c.l.b16 %v428
    %v1021 = vunpack.c.l.b16 %v429
    %v1022 = vunpack.c.l.b16 %v430
    %v1023 = vunpack.c.l.b16 %v431
    %v1024 = vunpack.c.l.b16 %v432
    %v1025 = vunpack.c.l.b16 %v433
    %v1026 = vunpack.c.l.b16 %v434
    %v1027 = vunpack.c.l.b16 %v435
    %v1028 = vunpack.c.l.b16 %v436
    %v1029 = vunpack.c.l.b16 %v437
    %v1030 = vunpack.c.l.b16 %v438
    %v1031 = vunpack.c.l.b16 %v439
    %v1032 = vunpack.c.l.b16 %v440
    %v1033 = vunpack.c.l.b16 %v441
    %v1034 = vunpack.c.l.b16 %v442
    %v1035 = vunpack.c.l.b16 %v443
    %v1036 = vunpack.c.l.b16 %v444
    %v1037 = vunpack.c.l.b16 %v445
    %v1038 = vunpack.c.l.b16 %v446
    %v1039 = vunpack.c.l.b16 %v447
    %v1040 = vunpack.c.l.b16 %v448
    %v1041 = vunpack.c.l.b16 %v449
    %v1042 = vunpack.c.l.b16 %v450
    %v1043 = vunpack.c.l.b16 %v451
    %v1044 = vunpack.c.l.b16 %v452
    %v1045 = vunpack.c.l.b16 %v453
    %v1046 = vunpack.c.l.b16 %v454
    %v1047 = vunpack.c.l.b16 %v455
    %v1048 = vunpack.c.l.b16 %v456
    %v1049 = vunpack.c.l.b16 %v457
    %v1050 = vunpack.c.l.b16 %v458
    %v1051 = vunpack.c.l.b16 %v459
    %v1052 = vunpack.c.l.b16 %v460
    %v1053 = vunpack.c.l.b16 %v461
    %v1054 = vunpack.c.l.b16 %v462
    %v1055 = vunpack.c.l.b16 %v463
    %v1056 = vunpack.c.l.b16 %v464
    %v1057 = vunpack.c.l.b16 %v465
    %v1058 = vunpack.c.l.b16 %v466
    %v1059 = vunpack.c.l.b16 %v467
    %v1060 = vunpack.c.l.b16 %v468
    %v1061 = vunpack.c.l.b16 %v469
    %v1062 = vunpack.c.l.b16 %v470
    %v1063 = vunpack.c.l.b16 %v471
    %v1064 = vunpack.c.l.b16 %v472
    %v1065 = vunpack.c.l.b16 %v473
    %v1066 = vunpack.c.l.b16 %v474
    %v1067 = vunpack.c.l.b16 %v475
    %v1068 = vunpack.c.l.b16 %v476
    %v1069 = vunpack.c.l.b16 %v477
    %v1070 = vunpack.c.l.b16 %v478
    %v1071 = vunpack.c.l.b16 %v479
    %v1072 = vunpack.c.l.b16 %v480
    %v1073 = vunpack.c.l.b16 %v481
    %v1074 = vunpack.c.l.b16 %v482
    %v1075 = vunpack.c.l.b16 %v483
    %v1076 = vunpack.c.l.b16 %v484
    %v1077 = vunpack.c.l.b16 %v485
    %v1078 = vunpack.c.l.b16 %v486
    %v1079 = vunpack.c.l.b16 %v487
    %v1080 = vunpack.c.l.b16 %v488
    %v1081 = vunpack.c.l.b16 %v489
    %v1082 = vunpack.c.l.b16 %v490
    %v1083 = vunpack.c.l.b16 %v491
    %v1084 = vunpack.c.l.b16 %v492
    %v1085 = vunpack.c.l.b16 %v493
    %v1086 = vunpack.c.l.b16 %v494
    %v1087 = vunpack.c.l.b16 %v495
    %v1088 = vunpack.c.l.b16 %v496
    %v1089 = vunpack.c.l.b16 %v497
    %v1090 = vunpack.c.l.b16 %v498
    %v1091 = vunpack.c.l.b16 %v499
    %v1092 = vunpack.c.l.b16 %v500
    %v1093 = vunpack.c.l.b16 %v501
    %v1094 = vunpack.c.l.b16 %v502
    %v1095 = vunpack.c.l.b16 %v503
    %v1096 = vunpack.c.l.b16 %v504
    %v1097 = vunpack.c.l.b16 %v505
    %v1098 = vunpack.c.l.b16 %v506
    %v1099 = vunpack.c.l.b16 %v507
    %v1100 = vunpack.c.l.b16 %v508
    %v1101 = vunpack.c.l.b16 %v509
    %v1102 = vunpack.c.l.b16 %v510
    %v1103 = vunpack.c.l.b16 %v511
    %v1104 = vunpack.c.l.b16 %v512
    %v1105 = vunpack.c.l.b16 %v513
    %v1106 = vunpack.c.l.b16 %v514
    %v1107 = vunpack.c.l.b16 %v515
    %v1108 = vunpack.c.l.b16 %v516
    %v1109 = vunpack.c.l.b16 %v517
    %v1110 = vunpack.c.l.b16 %v518
    %v1111 = vunpack.c.l.b16 %v519
    %v1112 = vunpack.c.l.b16 %v520
    %v1113 = vunpack.c.l.b16 %v521
    %v1114 = vunpack.c.l.b16 %v522
    %v1115 = vunpack.c.l.b16 %v523
    %v1116 = vunpack.c.l.b16 %v524
    %v1117 = vunpack.c.l.b16 %v525
    %v1118 = vunpack.c.l.b16 %v526
    %v1119 = vunpack.c.l.b16 %v527
    %v1120 = vunpack.c.l.b16 %v528
    %v1121 = vunpack.c.l.b16 %v529
    %v1122 = vunpack.c.l.b16 %v530
    %v1123 = vunpack.c.l.b16 %v531
    %v1124 = vunpack.c.l.b16 %v532
    %v1125 = vunpack.c.l.b16 %v533
    %v1126 = vunpack.c.l.b16 %v534
    %v1127 = vunpack.c.l.b16 %v535
    %v1128 = vunpack.c.l.b16 %v536
    %v1129 = vunpack.c.l.b16 %v537
    %v1130 = vunpack.c.l.b16 %v538
    %v1131 = vunpack.c.l.b16 %v539
    %v1132 = vunpack.c.l.b16 %v540
    %v1133 = vunpack.c.l.b16 %v541
    %v1134 = vunpack.c.l.b16 %v542
    %v1135 = vunpack.c.l.b16 %v543
    %v1136 = vunpack.c.l.b16 %v544
    %v1137 = vunpack.c.l.b16 %v545
    %v1138 = vunpack.c.l.b16 %v546
    %v1139 = vunpack.c.l.b16 %v547
    %v1140 = vunpack.c.l.b16 %v548
    %v1141 = vunpack.c.l.b16 %v549
    %v1142 = vunpack.c.l.b16 %v550
    %v1143 = vunpack.c.l.b16 %v551
    %v1144 = vunpack.c.l.b16 %v552
    %v1145 = vunpack.c.l.b16 %v553
    %v1146 = vunpack.c.l.b16 %v554
    %v1147 = vunpack.c.l.b16 %v555
    %v1148 = vunpack.c.l.b16 %v556
    %v1149 = vunpack.c.l.b16 %v557
    %v1150 = vunpack.c.l.b16 %v558
    %v1151 = vunpack.c.l.b16 %v559
    %v1152 = vunpack.c.l.b16 %v560
    %v1153 = vunpack.c.l.b16 %v561
    %v1154 = vunpack.c.l.b16 %v562
    %v1155 = vunpack.c.l.b16 %v563
    %v1156 = vunpack.c.l.b16 %v564
    %v1157 = vunpack.c.l.b16 %v565
    %v1158 = vunpack.c.l.b16 %v566
    %v1159 = vunpack.c.l.b16 %v567
    %v1160 = vunpack.c.l.b16 %v568
    %v1161 = vunpack.c.l.b16 %v569
    %v1162 = vunpack.c.l.b16 %v570
    %v1163 = vunpack.c.l.b16 %v571
    %v1164 = vunpack.c.l.b16 %v572
    %v1165 = vunpack.c.l.b16 %v573
    %v1166 = vunpack.c.l.b16 %v574
    %v1167 = vunpack.c.l.b16 %v575
    %v1168 = vunpack.c.l.b16 %v576
    %v1169 = vunpack.c.l.b16 %v577
    %v1170 = vunpack.c.l.b16 %v578
    %v1171 = vunpack.c.l.b16 %v579
    %v1172 = vunpack.c.l.b16 %v580
    %v1173 = vunpack.c.l.b16 %v581
    %v1174 = vunpack.c.l.b16 %v582
    %v1175 = vunpack.c.l.b16 %v583
    %v1176 = vunpack.c.l.b16 %v584
    %v1177 = vunpack.c.l.b16 %v585
    %v1178 = vunpack.c.l.b16 %v586
    %v1179 = vunpack.c.l.b16 %v587
    %v1180 = vunpack.c.l.b16 %v588
    %v1181 = vunpack.c.l.b16 %v589
    %v1182 = vunpack.c.l.b16 %v590
    %v1183 = vunpack.c.l.b16 %v591
    %v1184 = vunpack.c.l.b16 %v592
    %v1185 = vunpack.c.l.b16 %v593
    %v1186 = vunpack.c.l.b16 %v594
    %v1187 = vunpack.c.l.b16 %v595
    %v1188 = vunpack.c.l.b16 %v596
    %v1189 = vunpack.c.l.b16 %v597
    %v1190 = vunpack.c.l.b16 %v598
    %v1191 = vunpack.c.l.b16 %v599
    %v1192 = vunpack.c.l.b16 %v600
    %v1193 = vunpack.c.l.b16 %v601
    %v1194 = vunpack.c.l.b16 %v602
    %v1195 = vunpack.c.l.b16 %v603
    %v1196 = vunpack.c.l.b16 %v604
    %v1197 = vunpack.c.l.b16 %v605
    %v1198 = vunpack.c.l.b16 %v606
    %v1199 = vunpack.c.l.b16 %v607
    %v1200 = vunpack.c.l.b16 %v608
    %v1201 = vunpack.c.l.b16 %v609
    %v1202 = vunpack.c.l.b16 %v610
    %v1203 = vunpack.c.l.b16 %v611
    %v1204 = vunpack.c.l.b16 %v612
    %v1205 = vunpack.c.l.b16 %v613
    %v1206 = vunpack.c.l.b16 %v614
    %v1207 = vunpack.c.l.b16 %v615
    %v1208 = vunpack.c.l.b16 %v616
    %v1209 = vunpack.c.l.b16 %v617
    %v1210 = vunpack.c.l.b16 %v618
    %v1211 = vunpack.c.l.b16 %v619
    %v1212 = vunpack.c.l.b16 %v620
    %v1213 = vpack.c.b16 %v958, %v957
    %v1214 = vpack.c.b16 %v960, %v959
    %v1215 = vpack.c.b16 %v962, %v961
    %v1216 = vpack.c.b16 %v964, %v963
    %v1217 = vpack.c.b16 %v966, %v965
    %v1218 = vpack.c.b16 %v968, %v967
    %v1219 = vpack.c.b16 %v970, %v969
    %v1220 = vpack.c.b16 %v972, %v971
    %v1221 = vpack.c.b16 %v974, %v973
    %v1222 = vpack.c.b16 %v976, %v975
    %v1223 = vpack.c.b16 %v978, %v977
    %v1224 = vpack.c.b16 %v980, %v979
    %v1225 = vpack.c.b16 %v982, %v981
    %v1226 = vpack.c.b16 %v984, %v983
    %v1227 = vpack.c.b16 %v986, %v985
    %v1228 = vpack.c.b16 %v988, %v987
    %v1229 = vpack.c.b16 %v990, %v989
    %v1230 = vpack.c.b16 %v992, %v991
    %v1231 = vpack.c.b16 %v994, %v993
    %v1232 = vpack.c.b16 %v996, %v995
    %v1233 = vpack.c.b16 %v998, %v997
    %v1234 = vpack.c.b16 %v1000, %v999
    %v1235 = vpack.c.b16 %v1002, %v1001
    %v1236 = vpack.c.b16 %v1004, %v1003
    %v1237 = vpack.c.b16 %v1006, %v1005
    %v1238 = vpack.c.b16 %v1008, %v1007
    %v1239 = vpack.c.b16 %v1010, %v1009
    %v1240 = vpack.c.b16 %v1012, %v1011
    %v1241 = vpack.c.b16 %v1014, %v1013
    %v1242 = vpack.c.b16 %v1016, %v1015
    %v1243 = vpack.c.b16 %v1018, %v1017
    %v1244 = vpack.c.b16 %v1020, %v1019
    %v1245 = vpack.c.b16 %v1022, %v1021
    %v1246 = vpack.c.b16 %v1024, %v1023
    %v1247 = vpack.c.b16 %v1026, %v1025
    %v1248 = vpack.c.b16 %v1028, %v1027
    %v1249 = vpack.c.b16 %v1030, %v1029
    %v1250 = vpack.c.b16 %v1032, %v1031
    %v1251 = vpack.c.b16 %v1034, %v1033
    %v1252 = vpack.c.b16 %v1036, %v1035
    %v1253 = vpack.c.b16 %v1038, %v1037
    %v1254 = vpack.c.b16 %v1040, %v1039
    %v1255 = vpack.c.b16 %v1042, %v1041
    %v1256 = vpack.c.b16 %v1044, %v1043
    %v1257 = vpack.c.b16 %v1046, %v1045
    %v1258 = vpack.c.b16 %v1048, %v1047
    %v1259 = vpack.c.b16 %v1050, %v1049
    %v1260 = vpack.c.b16 %v1052, %v1051
    %v1261 = vpack.c.b16 %v1054, %v1053
    %v1262 = vpack.c.b16 %v1056, %v1055
    %v1263 = vpack.c.b16 %v1058, %v1057
    %v1264 = vpack.c.b16 %v1060, %v1059
    %v1265 = vpack.c.b16 %v1062, %v1061
    %v1266 = vpack.c.b16 %v1064, %v1063
    %v1267 = vpack.c.b16 %v1066, %v1065
    %v1268 = vpack.c.b16 %v1068, %v1067
    %v1269 = vpack.c.b16 %v1070, %v1069
    %v1270 = vpack.c.b16 %v1072, %v1071
    %v1271 = vpack.c.b16 %v1074, %v1073
    %v1272 = vpack.c.b16 %v1076, %v1075
    %v1273 = vpack.c.b16 %v1078, %v1077
    %v1274 = vpack.c.b16 %v1080, %v1079
    %v1275 = vpack.c.b16 %v1082, %v1081
    %v1276 = vpack.c.b16 %v1084, %v1083
    %v1277 = vpack.c.b16 %v1086, %v1085
    %v1278 = vpack.c.b16 %v1088, %v1087
    %v1279 = vpack.c.b16 %v1090, %v1089
    %v1280 = vpack.c.b16 %v1092, %v1091
    %v1281 = vpack.c.b16 %v1094, %v1093
    %v1282 = vpack.c.b16 %v1096, %v1095
    %v1283 = vpack.c.b16 %v1098, %v1097
    %v1284 = vpack.c.b16 %v1100, %v1099
    %v1285 = vpack.c.b16 %v1102, %v1101
    %v1286 = vpack.c.b16 %v1104, %v1103
    %v1287 = vpack.c.b16 %v1106, %v1105
    %v1288 = vpack.c.b16 %v1108, %v1107
    %v1289 = vpack.c.b16 %v1110, %v1109
    %v1290 = vpack.c.b16 %v1112, %v1111
    %v1291 = vpack.c.b16 %v1114, %v1113
    %v1292 = vpack.c.b16 %v1116, %v1115
    %v1293 = vpack.c.b16 %v1118, %v1117
    %v1294 = vpack.c.b16 %v1120, %v1119
    %v1295 = vpack.c.b16 %v1122, %v1121
    %v1296 = vpack.c.b16 %v1124, %v1123
    %v1297 = vpack.c.b16 %v1126, %v1125
    %v1298 = vpack.c.b16 %v1128, %v1127
    %v1299 = vpack.c.b16 %v1130, %v1129
    %v1300 = vpack.c.b16 %v1132, %v1131
    %v1301 = vpack.c.b16 %v1134, %v1133
    %v1302 = vpack.c.b16 %v1136, %v1135
    %v1303 = vpack.c.b16 %v1138, %v1137
    %v1304 = vpack.c.b16 %v1140, %v1139
    %v1305 = vpack.c.b16 %v1142, %v1141
    %v1306 = vpack.c.b16 %v1144, %v1143
    %v1307 = vpack.c.b16 %v1146, %v1145
    %v1308 = vpack.c.b16 %v1148, %v1147
    %v1309 = vpack.c.b16 %v1150, %v1149
    %v1310 = vpack.c.b16 %v1152, %v1151
    %v1311 = vpack.c.b16 %v1154, %v1153
    %v1312 = vpack.c.b16 %v1156, %v1155
    %v1313 = vpack.c.b16 %v1158, %v1157
    %v1314 = vpack.c.b16 %v1160, %v1159
    %v1315 = vpack.c.b16 %v1162, %v1161
    %v1316 = vpack.c.b16 %v1164, %v1163
    %v1317 = vpack.c.b16 %v1166, %v1165
    %v1318 = vpack.c.b16 %v1168, %v1167
    %v1319 = vpack.c.b16 %v1170, %v1169
    %v1320 = vpack.c.b16 %v1172, %v1171
    %v1321 = vpack.c.b16 %v1174, %v1173
    %v1322 = vpack.c.b16 %v1176, %v1175
    %v1323 = vpack.c.b16 %v1178, %v1177
    %v1324 = vpack.c.b16 %v1180, %v1179
    %v1325 = vpack.c.b16 %v1182, %v1181
    %v1326 = vpack.c.b16 %v1184, %v1183
    %v1327 = vpack.c.b16 %v1186, %v1185
    %v1328 = vpack.c.b16 %v1188, %v1187
    %v1329 = vpack.c.b16 %v1190, %v1189
    %v1330 = vpack.c.b16 %v1192, %v1191
    %v1331 = vpack.c.b16 %v1194, %v1193
    %v1332 = vpack.c.b16 %v1196, %v1195
    %v1333 = vpack.c.b16 %v1198, %v1197
    %v1334 = vpack.c.b16 %v1200, %v1199
    %v1335 = vpack.c.b16 %v1202, %v1201
    %v1336 = vpack.c.b16 %v1204, %v1203
    %v1337 = vpack.c.b16 %v1206, %v1205
    %v1338 = vpack.c.b16 %v1208, %v1207
    %v1339 = vpack.c.b16 %v1210, %v1209
    %v1340 = vpack.c.b16 %v1212, %v1211
    %1469 = vmatprep.subr.bf16.mxu0 0
    %1470 = vmatpush1.bf16.msra.mxu0 %v1213
    %1471 = vmatprep.subr.bf16.mxu0 0
    %1472 = vmatpush1.bf16.msra.mxu0 %v1214
    %1473 = vmatprep.subr.bf16.mxu0 0
    %1474 = vmatpush1.bf16.msra.mxu0 %v1215
    %1475 = vmatprep.subr.bf16.mxu0 0
    %1476 = vmatpush1.bf16.msra.mxu0 %v1216
    %1477 = vmatprep.subr.bf16.mxu0 0
    %1478 = vmatpush1.bf16.msra.mxu0 %v1217
    %1479 = vmatprep.subr.bf16.mxu0 0
    %1480 = vmatpush1.bf16.msra.mxu0 %v1218
    %1481 = vmatprep.subr.bf16.mxu0 0
    %1482 = vmatpush1.bf16.msra.mxu0 %v1219
    %1483 = vmatprep.subr.bf16.mxu0 0
    %1484 = vmatpush1.bf16.msra.mxu0 %v1220
    %1485 = vmatprep.subr.bf16.mxu0 0
    %1486 = vmatpush1.bf16.msra.mxu0 %v1221
    %1487 = vmatprep.subr.bf16.mxu0 0
    %1488 = vmatpush1.bf16.msra.mxu0 %v1222
    %1489 = vmatprep.subr.bf16.mxu0 0
    %1490 = vmatpush1.bf16.msra.mxu0 %v1223
    %1491 = vmatprep.subr.bf16.mxu0 0
    %1492 = vmatpush1.bf16.msra.mxu0 %v1224
    %1493 = vmatprep.subr.bf16.mxu0 0
    %1494 = vmatpush1.bf16.msra.mxu0 %v1225
    %1495 = vmatprep.subr.bf16.mxu0 0
    %1496 = vmatpush1.bf16.msra.mxu0 %v1226
    %1497 = vmatprep.subr.bf16.mxu0 0
    %1498 = vmatpush1.bf16.msra.mxu0 %v1227
    %1499 = vmatprep.subr.bf16.mxu0 0
    %1500 = vmatpush1.bf16.msra.mxu0 %v1228
    %1501 = vmatprep.mubr.bf16.mxu0 %v670
    %1502 = vmatmul.mubr.bf16.gmra.mrb[0].mxu0 %v669
    %v1503 = vpop.f32.mrb[0].mxu0
    %v1504 = vadd.f32 0.0, %v1503
    %v1505 = vpop.f32.mrb[0].mxu0
    %v1506 = vpop.f32.mrb[0].mxu0
    %v1507 = vadd.f32 0.0, %v1506
    %v1508 = vpop.f32.mrb[0].mxu0
    %1509 = vdwg.mxu0
    %1510 = vmatprep.subr.bf16.mxu0 0
    %1511 = vmatpush1.bf16.msra.mxu0 %v1229
    %1512 = vmatprep.subr.bf16.mxu0 0
    %1513 = vmatpush1.bf16.msra.mxu0 %v1230
    %1514 = vmatprep.subr.bf16.mxu0 0
    %1515 = vmatpush1.bf16.msra.mxu0 %v1231
    %1516 = vmatprep.subr.bf16.mxu0 0
    %1517 = vmatpush1.bf16.msra.mxu0 %v1232
    %1518 = vmatprep.subr.bf16.mxu0 0
    %1519 = vmatpush1.bf16.msra.mxu0 %v1233
    %1520 = vmatprep.subr.bf16.mxu0 0
    %1521 = vmatpush1.bf16.msra.mxu0 %v1234
    %1522 = vmatprep.subr.bf16.mxu0 0
    %1523 = vmatpush1.bf16.msra.mxu0 %v1235
    %1524 = vmatprep.subr.bf16.mxu0 0
    %1525 = vmatpush1.bf16.msra.mxu0 %v1236
    %1526 = vmatprep.subr.bf16.mxu0 0
    %1527 = vmatpush1.bf16.msra.mxu0 %v1237
    %1528 = vmatprep.subr.bf16.mxu0 0
    %1529 = vmatpush1.bf16.msra.mxu0 %v1238
    %1530 = vmatprep.subr.bf16.mxu0 0
    %1531 = vmatpush1.bf16.msra.mxu0 %v1239
    %1532 = vmatprep.subr.bf16.mxu0 0
    %1533 = vmatpush1.bf16.msra.mxu0 %v1240
    %1534 = vmatprep.subr.bf16.mxu0 0
    %1535 = vmatpush1.bf16.msra.mxu0 %v1241
    %1536 = vmatprep.subr.bf16.mxu0 0
    %1537 = vmatpush1.bf16.msra.mxu0 %v1242
    %1538 = vmatprep.subr.bf16.mxu0 0
    %1539 = vmatpush1.bf16.msra.mxu0 %v1243
    %1540 = vmatprep.subr.bf16.mxu0 0
    %1541 = vmatpush1.bf16.msra.mxu0 %v1244
    %1542 = vmatprep.mubr.bf16.mxu0 %v672
    %1543 = vmatmul.mubr.bf16.gmra.mrb[0].mxu0 %v671
    %v1544 = vpop.f32.mrb[0].mxu0
    %v1545 = vadd.f32 %v1504, %v1544
    %v1546 = vpop.f32.mrb[0].mxu0
    %v1547 = vpop.f32.mrb[0].mxu0
    %v1548 = vadd.f32 %v1507, %v1547
    %v1549 = vpop.f32.mrb[0].mxu0
    %1550 = vdwg.mxu0
    %1551 = vmatprep.subr.bf16.mxu0 0
    %1552 = vmatpush1.bf16.msra.mxu0 %v1245
    %1553 = vmatprep.subr.bf16.mxu0 0
    %1554 = vmatpush1.bf16.msra.mxu0 %v1246
    %1555 = vmatprep.subr.bf16.mxu0 0
    %1556 = vmatpush1.bf16.msra.mxu0 %v1247
    %1557 = vmatprep.subr.bf16.mxu0 0
    %1558 = vmatpush1.bf16.msra.mxu0 %v1248
    %1559 = vmatprep.subr.bf16.mxu0 0
    %1560 = vmatpush1.bf16.msra.mxu0 %v1249
    %1561 = vmatprep.subr.bf16.mxu0 0
    %1562 = vmatpush1.bf16.msra.mxu0 %v1250
    %1563 = vmatprep.subr.bf16.mxu0 0
    %1564 = vmatpush1.bf16.msra.mxu0 %v1251
    %1565 = vmatprep.subr.bf16.mxu0 0
    %1566 = vmatpush1.bf16.msra.mxu0 %v1252
    %1567 = vmatprep.subr.bf16.mxu0 0
    %1568 = vmatpush1.bf16.msra.mxu0 %v1253
    %1569 = vmatprep.subr.bf16.mxu0 0
    %1570 = vmatpush1.bf16.msra.mxu0 %v1254
    %1571 = vmatprep.subr.bf16.mxu0 0
    %1572 = vmatpush1.bf16.msra.mxu0 %v1255
    %1573 = vmatprep.subr.bf16.mxu0 0
    %1574 = vmatpush1.bf16.msra.mxu0 %v1256
    %1575 = vmatprep.subr.bf16.mxu0 0
    %1576 = vmatpush1.bf16.msra.mxu0 %v1257
    %1577 = vmatprep.subr.bf16.mxu0 0
    %1578 = vmatpush1.bf16.msra.mxu0 %v1258
    %1579 = vmatprep.subr.bf16.mxu0 0
    %1580 = vmatpush1.bf16.msra.mxu0 %v1259
    %1581 = vmatprep.subr.bf16.mxu0 0
    %1582 = vmatpush1.bf16.msra.mxu0 %v1260
    %1583 = vmatprep.mubr.bf16.mxu0 %v674
    %1584 = vmatmul.mubr.bf16.gmra.mrb[0].mxu0 %v673
    %v1585 = vpop.f32.mrb[0].mxu0
    %v1586 = vadd.f32 %v1545, %v1585
    %v1587 = vpop.f32.mrb[0].mxu0
    %v1588 = vpop.f32.mrb[0].mxu0
    %v1589 = vadd.f32 %v1548, %v1588
    %v1590 = vpop.f32.mrb[0].mxu0
    %1591 = vdwg.mxu0
    %1592 = vmatprep.subr.bf16.mxu0 0
    %1593 = vmatpush1.bf16.msra.mxu0 %v1261
    %1594 = vmatprep.subr.bf16.mxu0 0
    %1595 = vmatpush1.bf16.msra.mxu0 %v1262
    %1596 = vmatprep.subr.bf16.mxu0 0
    %1597 = vmatpush1.bf16.msra.mxu0 %v1263
    %1598 = vmatprep.subr.bf16.mxu0 0
    %1599 = vmatpush1.bf16.msra.mxu0 %v1264
    %1600 = vmatprep.subr.bf16.mxu0 0
    %1601 = vmatpush1.bf16.msra.mxu0 %v1265
    %1602 = vmatprep.subr.bf16.mxu0 0
    %1603 = vmatpush1.bf16.msra.mxu0 %v1266
    %1604 = vmatprep.subr.bf16.mxu0 0
    %1605 = vmatpush1.bf16.msra.mxu0 %v1267
    %1606 = vmatprep.subr.bf16.mxu0 0
    %1607 = vmatpush1.bf16.msra.mxu0 %v1268
    %1608 = vmatprep.subr.bf16.mxu0 0
    %1609 = vmatpush1.bf16.msra.mxu0 %v1269
    %1610 = vmatprep.subr.bf16.mxu0 0
    %1611 = vmatpush1.bf16.msra.mxu0 %v1270
    %1612 = vmatprep.subr.bf16.mxu0 0
    %1613 = vmatpush1.bf16.msra.mxu0 %v1271
    %1614 = vmatprep.subr.bf16.mxu0 0
    %1615 = vmatpush1.bf16.msra.mxu0 %v1272
    %1616 = vmatprep.subr.bf16.mxu0 0
    %1617 = vmatpush1.bf16.msra.mxu0 %v1273
    %1618 = vmatprep.subr.bf16.mxu0 0
    %1619 = vmatpush1.bf16.msra.mxu0 %v1274
    %1620 = vmatprep.subr.bf16.mxu0 0
    %1621 = vmatpush1.bf16.msra.mxu0 %v1275
    %1622 = vmatprep.subr.bf16.mxu0 0
    %1623 = vmatpush1.bf16.msra.mxu0 %v1276
    %1624 = vmatprep.mubr.bf16.mxu0 %v676
    %1625 = vmatmul.mubr.bf16.gmra.mrb[0].mxu0 %v675
    %v1626 = vpop.f32.mrb[0].mxu0
    %v1627 = vadd.f32 %v1586, %v1626
    %v1628 = vpop.f32.mrb[0].mxu0
    %v1629 = vpop.f32.mrb[0].mxu0
    %v1630 = vadd.f32 %v1589, %v1629
    %v1631 = vpop.f32.mrb[0].mxu0
    %1632 = vdwg.mxu0
    %1633 = vmatprep.subr.bf16.mxu0 0
    %1634 = vmatpush1.bf16.msra.mxu0 %v1277
    %1635 = vmatprep.subr.bf16.mxu0 0
    %1636 = vmatpush1.bf16.msra.mxu0 %v1278
    %1637 = vmatprep.subr.bf16.mxu0 0
    %1638 = vmatpush1.bf16.msra.mxu0 %v1279
    %1639 = vmatprep.subr.bf16.mxu0 0
    %1640 = vmatpush1.bf16.msra.mxu0 %v1280
    %1641 = vmatprep.subr.bf16.mxu0 0
    %1642 = vmatpush1.bf16.msra.mxu0 %v1281
    %1643 = vmatprep.subr.bf16.mxu0 0
    %1644 = vmatpush1.bf16.msra.mxu0 %v1282
    %1645 = vmatprep.subr.bf16.mxu0 0
    %1646 = vmatpush1.bf16.msra.mxu0 %v1283
    %1647 = vmatprep.subr.bf16.mxu0 0
    %1648 = vmatpush1.bf16.msra.mxu0 %v1284
    %1649 = vmatprep.subr.bf16.mxu0 0
    %1650 = vmatpush1.bf16.msra.mxu0 %v1285
    %1651 = vmatprep.subr.bf16.mxu0 0
    %1652 = vmatpush1.bf16.msra.mxu0 %v1286
    %1653 = vmatprep.subr.bf16.mxu0 0
    %1654 = vmatpush1.bf16.msra.mxu0 %v1287
    %1655 = vmatprep.subr.bf16.mxu0 0
    %1656 = vmatpush1.bf16.msra.mxu0 %v1288
    %1657 = vmatprep.subr.bf16.mxu0 0
    %1658 = vmatpush1.bf16.msra.mxu0 %v1289
    %1659 = vmatprep.subr.bf16.mxu0 0
    %1660 = vmatpush1.bf16.msra.mxu0 %v1290
    %1661 = vmatprep.subr.bf16.mxu0 0
    %1662 = vmatpush1.bf16.msra.mxu0 %v1291
    %1663 = vmatprep.subr.bf16.mxu0 0
    %1664 = vmatpush1.bf16.msra.mxu0 %v1292
    %1665 = vmatprep.mubr.bf16.mxu0 %v678
    %1666 = vmatmul.mubr.bf16.gmra.mrb[0].mxu0 %v677
    %v1667 = vpop.f32.mrb[0].mxu0
    %v1668 = vadd.f32 %v1627, %v1667
    %v1669 = vpop.f32.mrb[0].mxu0
    %v1670 = vpop.f32.mrb[0].mxu0
    %v1671 = vadd.f32 %v1630, %v1670
    %v1672 = vpop.f32.mrb[0].mxu0
    %1673 = vdwg.mxu0
    %1674 = vmatprep.subr.bf16.mxu0 0
    %1675 = vmatpush1.bf16.msra.mxu0 %v1293
    %1676 = vmatprep.subr.bf16.mxu0 0
    %1677 = vmatpush1.bf16.msra.mxu0 %v1294
    %1678 = vmatprep.subr.bf16.mxu0 0
    %1679 = vmatpush1.bf16.msra.mxu0 %v1295
    %1680 = vmatprep.subr.bf16.mxu0 0
    %1681 = vmatpush1.bf16.msra.mxu0 %v1296
    %1682 = vmatprep.subr.bf16.mxu0 0
    %1683 = vmatpush1.bf16.msra.mxu0 %v1297
    %1684 = vmatprep.subr.bf16.mxu0 0
    %1685 = vmatpush1.bf16.msra.mxu0 %v1298
    %1686 = vmatprep.subr.bf16.mxu0 0
    %1687 = vmatpush1.bf16.msra.mxu0 %v1299
    %1688 = vmatprep.subr.bf16.mxu0 0
    %1689 = vmatpush1.bf16.msra.mxu0 %v1300
    %1690 = vmatprep.subr.bf16.mxu0 0
    %1691 = vmatpush1.bf16.msra.mxu0 %v1301
    %1692 = vmatprep.subr.bf16.mxu0 0
    %1693 = vmatpush1.bf16.msra.mxu0 %v1302
    %1694 = vmatprep.subr.bf16.mxu0 0
    %1695 = vmatpush1.bf16.msra.mxu0 %v1303
    %1696 = vmatprep.subr.bf16.mxu0 0
    %1697 = vmatpush1.bf16.msra.mxu0 %v1304
    %1698 = vmatprep.subr.bf16.mxu0 0
    %1699 = vmatpush1.bf16.msra.mxu0 %v1305
    %1700 = vmatprep.subr.bf16.mxu0 0
    %1701 = vmatpush1.bf16.msra.mxu0 %v1306
    %1702 = vmatprep.subr.bf16.mxu0 0
    %1703 = vmatpush1.bf16.msra.mxu0 %v1307
    %1704 = vmatprep.subr.bf16.mxu0 0
    %1705 = vmatpush1.bf16.msra.mxu0 %v1308
    %1706 = vmatprep.mubr.bf16.mxu0 %v680
    %1707 = vmatmul.mubr.bf16.gmra.mrb[0].mxu0 %v679
    %v1708 = vpop.f32.mrb[0].mxu0
    %v1709 = vadd.f32 %v1668, %v1708
    %v1710 = vpop.f32.mrb[0].mxu0
    %v1711 = vpop.f32.mrb[0].mxu0
    %v1712 = vadd.f32 %v1671, %v1711
    %v1713 = vpop.f32.mrb[0].mxu0
    %1714 = vdwg.mxu0
    %1715 = vmatprep.subr.bf16.mxu0 0
    %1716 = vmatpush1.bf16.msra.mxu0 %v1309
    %1717 = vmatprep.subr.bf16.mxu0 0
    %1718 = vmatpush1.bf16.msra.mxu0 %v1310
    %1719 = vmatprep.subr.bf16.mxu0 0
    %1720 = vmatpush1.bf16.msra.mxu0 %v1311
    %1721 = vmatprep.subr.bf16.mxu0 0
    %1722 = vmatpush1.bf16.msra.mxu0 %v1312
    %1723 = vmatprep.subr.bf16.mxu0 0
    %1724 = vmatpush1.bf16.msra.mxu0 %v1313
    %1725 = vmatprep.subr.bf16.mxu0 0
    %1726 = vmatpush1.bf16.msra.mxu0 %v1314
    %1727 = vmatprep.subr.bf16.mxu0 0
    %1728 = vmatpush1.bf16.msra.mxu0 %v1315
    %1729 = vmatprep.subr.bf16.mxu0 0
    %1730 = vmatpush1.bf16.msra.mxu0 %v1316
    %1731 = vmatprep.subr.bf16.mxu0 0
    %1732 = vmatpush1.bf16.msra.mxu0 %v1317
    %1733 = vmatprep.subr.bf16.mxu0 0
    %1734 = vmatpush1.bf16.msra.mxu0 %v1318
    %1735 = vmatprep.subr.bf16.mxu0 0
    %1736 = vmatpush1.bf16.msra.mxu0 %v1319
    %1737 = vmatprep.subr.bf16.mxu0 0
    %1738 = vmatpush1.bf16.msra.mxu0 %v1320
    %1739 = vmatprep.subr.bf16.mxu0 0
    %1740 = vmatpush1.bf16.msra.mxu0 %v1321
    %1741 = vmatprep.subr.bf16.mxu0 0
    %1742 = vmatpush1.bf16.msra.mxu0 %v1322
    %1743 = vmatprep.subr.bf16.mxu0 0
    %1744 = vmatpush1.bf16.msra.mxu0 %v1323
    %1745 = vmatprep.subr.bf16.mxu0 0
    %1746 = vmatpush1.bf16.msra.mxu0 %v1324
    %1747 = vmatprep.mubr.bf16.mxu0 %v682
    %1748 = vmatmul.mubr.bf16.gmra.mrb[0].mxu0 %v681
    %v1749 = vpop.f32.mrb[0].mxu0
    %v1750 = vadd.f32 %v1709, %v1749
    %v1751 = vpop.f32.mrb[0].mxu0
    %v1752 = vpop.f32.mrb[0].mxu0
    %v1753 = vadd.f32 %v1712, %v1752
    %v1754 = vpop.f32.mrb[0].mxu0
    %1755 = vdwg.mxu0
    %1756 = vmatprep.subr.bf16.mxu0 0
    %1757 = vmatpush1.bf16.msra.mxu0 %v1325
    %1758 = vmatprep.subr.bf16.mxu0 0
    %1759 = vmatpush1.bf16.msra.mxu0 %v1326
    %1760 = vmatprep.subr.bf16.mxu0 0
    %1761 = vmatpush1.bf16.msra.mxu0 %v1327
    %1762 = vmatprep.subr.bf16.mxu0 0
    %1763 = vmatpush1.bf16.msra.mxu0 %v1328
    %1764 = vmatprep.subr.bf16.mxu0 0
    %1765 = vmatpush1.bf16.msra.mxu0 %v1329
    %1766 = vmatprep.subr.bf16.mxu0 0
    %1767 = vmatpush1.bf16.msra.mxu0 %v1330
    %1768 = vmatprep.subr.bf16.mxu0 0
    %1769 = vmatpush1.bf16.msra.mxu0 %v1331
    %1770 = vmatprep.subr.bf16.mxu0 0
    %1771 = vmatpush1.bf16.msra.mxu0 %v1332
    %1772 = vmatprep.subr.bf16.mxu0 0
    %1773 = vmatpush1.bf16.msra.mxu0 %v1333
    %1774 = vmatprep.subr.bf16.mxu0 0
    %1775 = vmatpush1.bf16.msra.mxu0 %v1334
    %1776 = vmatprep.subr.bf16.mxu0 0
    %1777 = vmatpush1.bf16.msra.mxu0 %v1335
    %1778 = vmatprep.subr.bf16.mxu0 0
    %1779 = vmatpush1.bf16.msra.mxu0 %v1336
    %1780 = vmatprep.subr.bf16.mxu0 0
    %1781 = vmatpush1.bf16.msra.mxu0 %v1337
    %1782 = vmatprep.subr.bf16.mxu0 0
    %1783 = vmatpush1.bf16.msra.mxu0 %v1338
    %1784 = vmatprep.subr.bf16.mxu0 0
    %1785 = vmatpush1.bf16.msra.mxu0 %v1339
    %1786 = vmatprep.subr.bf16.mxu0 0
    %1787 = vmatpush1.bf16.msra.mxu0 %v1340
    %1788 = vmatprep.mubr.bf16.mxu0 %v684
    %1789 = vmatmul.mubr.bf16.gmra.mrb[0].mxu0 %v683
    %v1790 = vpop.f32.mrb[0].mxu0
    %v1791 = vadd.f32 %v1750, %v1790
    %v1792 = vpop.f32.mrb[0].mxu0
    %v1793 = vpop.f32.mrb[0].mxu0
    %v1794 = vadd.f32 %v1753, %v1793
    %v1795 = vpop.f32.mrb[0].mxu0
    %1796 = vdwg.mxu0
    %v1813 = vunpack.c.l.b16 %v77
    %v1814 = vunpack.c.h.b16 %v77
    %v1815 = vunpack.c.l.b16 %v78
    %v1816 = vunpack.c.h.b16 %v78
    %v1817 = vunpack.c.l.b16 %v79
    %v1818 = vunpack.c.h.b16 %v79
    %v1819 = vunpack.c.l.b16 %v80
    %v1820 = vunpack.c.h.b16 %v80
    %v1821 = vunpack.c.l.b16 %v81
    %v1822 = vunpack.c.h.b16 %v81
    %v1823 = vunpack.c.l.b16 %v82
    %v1824 = vunpack.c.h.b16 %v82
    %v1825 = vunpack.c.l.b16 %v83
    %v1826 = vunpack.c.h.b16 %v83
    %v1827 = vunpack.c.l.b16 %v84
    %v1828 = vunpack.c.h.b16 %v84
    %v1829 = vunpack.c.l.b16 %v85
    %v1830 = vunpack.c.h.b16 %v85
    %v1831 = vunpack.c.l.b16 %v86
    %v1832 = vunpack.c.h.b16 %v86
    %v1833 = vunpack.c.l.b16 %v87
    %v1834 = vunpack.c.h.b16 %v87
    %v1835 = vunpack.c.l.b16 %v88
    %v1836 = vunpack.c.h.b16 %v88
    %v1837 = vunpack.c.l.b16 %v89
    %v1838 = vunpack.c.h.b16 %v89
    %v1839 = vunpack.c.l.b16 %v90
    %v1840 = vunpack.c.h.b16 %v90
    %v1841 = vunpack.c.l.b16 %v91
    %v1842 = vunpack.c.h.b16 %v91
    %v1843 = vunpack.c.l.b16 %v92
    %v1844 = vunpack.c.h.b16 %v92
    %v1845 = vpack.c.b16 %v1829, %v1813
    %v1846 = vpack.c.b16 %v1830, %v1814
    %v1847 = vpack.c.b16 %v1831, %v1815
    %v1848 = vpack.c.b16 %v1832, %v1816
    %v1849 = vpack.c.b16 %v1833, %v1817
    %v1850 = vpack.c.b16 %v1834, %v1818
    %v1851 = vpack.c.b16 %v1835, %v1819
    %v1852 = vpack.c.b16 %v1836, %v1820
    %v1853 = vpack.c.b16 %v1837, %v1821
    %v1854 = vpack.c.b16 %v1838, %v1822
    %v1855 = vpack.c.b16 %v1839, %v1823
    %v1856 = vpack.c.b16 %v1840, %v1824
    %v1857 = vpack.c.b16 %v1841, %v1825
    %v1858 = vpack.c.b16 %v1842, %v1826
    %v1859 = vpack.c.b16 %v1843, %v1827
    %v1860 = vpack.c.b16 %v1844, %v1828
    %v2133 = vunpack.c.l.b16 %v93
    %v2134 = vunpack.c.l.b16 %v94
    %v2135 = vunpack.c.l.b16 %v95
    %v2136 = vunpack.c.l.b16 %v96
    %v2137 = vunpack.c.l.b16 %v97
    %v2138 = vunpack.c.l.b16 %v98
    %v2139 = vunpack.c.l.b16 %v99
    %v2140 = vunpack.c.l.b16 %v100
    %v2141 = vunpack.c.l.b16 %v101
    %v2142 = vunpack.c.l.b16 %v102
    %v2143 = vunpack.c.l.b16 %v103
    %v2144 = vunpack.c.l.b16 %v104
    %v2145 = vunpack.c.l.b16 %v105
    %v2146 = vunpack.c.l.b16 %v106
    %v2147 = vunpack.c.l.b16 %v107
    %v2148 = vunpack.c.l.b16 %v108
    %v2149 = vunpack.c.l.b16 %v109
    %v2150 = vunpack.c.l.b16 %v110
    %v2151 = vunpack.c.l.b16 %v111
    %v2152 = vunpack.c.l.b16 %v112
    %v2153 = vunpack.c.l.b16 %v113
    %v2154 = vunpack.c.l.b16 %v114
    %v2155 = vunpack.c.l.b16 %v115
    %v2156 = vunpack.c.l.b16 %v116
    %v2157 = vunpack.c.l.b16 %v117
    %v2158 = vunpack.c.l.b16 %v118
    %v2159 = vunpack.c.l.b16 %v119
    %v2160 = vunpack.c.l.b16 %v120
    %v2161 = vunpack.c.l.b16 %v121
    %v2162 = vunpack.c.l.b16 %v122
    %v2163 = vunpack.c.l.b16 %v123
    %v2164 = vunpack.c.l.b16 %v124
    %v2165 = vunpack.c.l.b16 %v125
    %v2166 = vunpack.c.l.b16 %v126
    %v2167 = vunpack.c.l.b16 %v127
    %v2168 = vunpack.c.l.b16 %v128
    %v2169 = vunpack.c.l.b16 %v129
    %v2170 = vunpack.c.l.b16 %v130
    %v2171 = vunpack.c.l.b16 %v131
    %v2172 = vunpack.c.l.b16 %v132
    %v2173 = vunpack.c.l.b16 %v133
    %v2174 = vunpack.c.l.b16 %v134
    %v2175 = vunpack.c.l.b16 %v135
    %v2176 = vunpack.c.l.b16 %v136
    %v2177 = vunpack.c.l.b16 %v137
    %v2178 = vunpack.c.l.b16 %v138
    %v2179 = vunpack.c.l.b16 %v139
    %v2180 = vunpack.c.l.b16 %v140
    %v2181 = vunpack.c.l.b16 %v141
    %v2182 = vunpack.c.l.b16 %v142
    %v2183 = vunpack.c.l.b16 %v143
    %v2184 = vunpack.c.l.b16 %v144
    %v2185 = vunpack.c.l.b16 %v145
    %v2186 = vunpack.c.l.b16 %v146
    %v2187 = vunpack.c.l.b16 %v147
    %v2188 = vunpack.c.l.b16 %v148
    %v2189 = vunpack.c.l.b16 %v149
    %v2190 = vunpack.c.l.b16 %v150
    %v2191 = vunpack.c.l.b16 %v151
    %v2192 = vunpack.c.l.b16 %v152
    %v2193 = vunpack.c.l.b16 %v153
    %v2194 = vunpack.c.l.b16 %v154
    %v2195 = vunpack.c.l.b16 %v155
    %v2196 = vunpack.c.l.b16 %v156
    %v2197 = vunpack.c.l.b16 %v157
    %v2198 = vunpack.c.l.b16 %v158
    %v2199 = vunpack.c.l.b16 %v159
    %v2200 = vunpack.c.l.b16 %v160
    %v2201 = vunpack.c.l.b16 %v161
    %v2202 = vunpack.c.l.b16 %v162
    %v2203 = vunpack.c.l.b16 %v163
    %v2204 = vunpack.c.l.b16 %v164
    %v2205 = vunpack.c.l.b16 %v165
    %v2206 = vunpack.c.l.b16 %v166
    %v2207 = vunpack.c.l.b16 %v167
    %v2208 = vunpack.c.l.b16 %v168
    %v2209 = vunpack.c.l.b16 %v169
    %v2210 = vunpack.c.l.b16 %v170
    %v2211 = vunpack.c.l.b16 %v171
    %v2212 = vunpack.c.l.b16 %v172
    %v2213 = vunpack.c.l.b16 %v173
    %v2214 = vunpack.c.l.b16 %v174
    %v2215 = vunpack.c.l.b16 %v175
    %v2216 = vunpack.c.l.b16 %v176
    %v2217 = vunpack.c.l.b16 %v177
    %v2218 = vunpack.c.l.b16 %v178
    %v2219 = vunpack.c.l.b16 %v179
    %v2220 = vunpack.c.l.b16 %v180
    %v2221 = vunpack.c.l.b16 %v181
    %v2222 = vunpack.c.l.b16 %v182
    %v2223 = vunpack.c.l.b16 %v183
    %v2224 = vunpack.c.l.b16 %v184
    %v2225 = vunpack.c.l.b16 %v185
    %v2226 = vunpack.c.l.b16 %v186
    %v2227 = vunpack.c.l.b16 %v187
    %v2228 = vunpack.c.l.b16 %v188
    %v2229 = vunpack.c.l.b16 %v189
    %v2230 = vunpack.c.l.b16 %v190
    %v2231 = vunpack.c.l.b16 %v191
    %v2232 = vunpack.c.l.b16 %v192
    %v2233 = vunpack.c.l.b16 %v193
    %v2234 = vunpack.c.l.b16 %v194
    %v2235 = vunpack.c.l.b16 %v195
    %v2236 = vunpack.c.l.b16 %v196
    %v2237 = vunpack.c.l.b16 %v197
    %v2238 = vunpack.c.l.b16 %v198
    %v2239 = vunpack.c.l.b16 %v199
    %v2240 = vunpack.c.l.b16 %v200
    %v2241 = vunpack.c.l.b16 %v201
    %v2242 = vunpack.c.l.b16 %v202
    %v2243 = vunpack.c.l.b16 %v203
    %v2244 = vunpack.c.l.b16 %v204
    %v2245 = vunpack.c.l.b16 %v205
    %v2246 = vunpack.c.l.b16 %v206
    %v2247 = vunpack.c.l.b16 %v207
    %v2248 = vunpack.c.l.b16 %v208
    %v2249 = vunpack.c.l.b16 %v209
    %v2250 = vunpack.c.l.b16 %v210
    %v2251 = vunpack.c.l.b16 %v211
    %v2252 = vunpack.c.l.b16 %v212
    %v2253 = vunpack.c.l.b16 %v213
    %v2254 = vunpack.c.l.b16 %v214
    %v2255 = vunpack.c.l.b16 %v215
    %v2256 = vunpack.c.l.b16 %v216
    %v2257 = vunpack.c.l.b16 %v217
    %v2258 = vunpack.c.l.b16 %v218
    %v2259 = vunpack.c.l.b16 %v219
    %v2260 = vunpack.c.l.b16 %v220
    %v2261 = vunpack.c.l.b16 %v221
    %v2262 = vunpack.c.l.b16 %v222
    %v2263 = vunpack.c.l.b16 %v223
    %v2264 = vunpack.c.l.b16 %v224
    %v2265 = vunpack.c.l.b16 %v225
    %v2266 = vunpack.c.l.b16 %v226
    %v2267 = vunpack.c.l.b16 %v227
    %v2268 = vunpack.c.l.b16 %v228
    %v2269 = vunpack.c.l.b16 %v229
    %v2270 = vunpack.c.l.b16 %v230
    %v2271 = vunpack.c.l.b16 %v231
    %v2272 = vunpack.c.l.b16 %v232
    %v2273 = vunpack.c.l.b16 %v233
    %v2274 = vunpack.c.l.b16 %v234
    %v2275 = vunpack.c.l.b16 %v235
    %v2276 = vunpack.c.l.b16 %v236
    %v2277 = vunpack.c.l.b16 %v237
    %v2278 = vunpack.c.l.b16 %v238
    %v2279 = vunpack.c.l.b16 %v239
    %v2280 = vunpack.c.l.b16 %v240
    %v2281 = vunpack.c.l.b16 %v241
    %v2282 = vunpack.c.l.b16 %v242
    %v2283 = vunpack.c.l.b16 %v243
    %v2284 = vunpack.c.l.b16 %v244
    %v2285 = vunpack.c.l.b16 %v245
    %v2286 = vunpack.c.l.b16 %v246
    %v2287 = vunpack.c.l.b16 %v247
    %v2288 = vunpack.c.l.b16 %v248
    %v2289 = vunpack.c.l.b16 %v249
    %v2290 = vunpack.c.l.b16 %v250
    %v2291 = vunpack.c.l.b16 %v251
    %v2292 = vunpack.c.l.b16 %v252
    %v2293 = vunpack.c.l.b16 %v253
    %v2294 = vunpack.c.l.b16 %v254
    %v2295 = vunpack.c.l.b16 %v255
    %v2296 = vunpack.c.l.b16 %v256
    %v2297 = vunpack.c.l.b16 %v257
    %v2298 = vunpack.c.l.b16 %v258
    %v2299 = vunpack.c.l.b16 %v259
    %v2300 = vunpack.c.l.b16 %v260
    %v2301 = vunpack.c.l.b16 %v261
    %v2302 = vunpack.c.l.b16 %v262
    %v2303 = vunpack.c.l.b16 %v263
    %v2304 = vunpack.c.l.b16 %v264
    %v2305 = vunpack.c.l.b16 %v265
    %v2306 = vunpack.c.l.b16 %v266
    %v2307 = vunpack.c.l.b16 %v267
    %v2308 = vunpack.c.l.b16 %v268
    %v2309 = vunpack.c.l.b16 %v269
    %v2310 = vunpack.c.l.b16 %v270
    %v2311 = vunpack.c.l.b16 %v271
    %v2312 = vunpack.c.l.b16 %v272
    %v2313 = vunpack.c.l.b16 %v273
    %v2314 = vunpack.c.l.b16 %v274
    %v2315 = vunpack.c.l.b16 %v275
    %v2316 = vunpack.c.l.b16 %v276
    %v2317 = vunpack.c.l.b16 %v277
    %v2318 = vunpack.c.l.b16 %v278
    %v2319 = vunpack.c.l.b16 %v279
    %v2320 = vunpack.c.l.b16 %v280
    %v2321 = vunpack.c.l.b16 %v281
    %v2322 = vunpack.c.l.b16 %v282
    %v2323 = vunpack.c.l.b16 %v283
    %v2324 = vunpack.c.l.b16 %v284
    %v2325 = vunpack.c.l.b16 %v285
    %v2326 = vunpack.c.l.b16 %v286
    %v2327 = vunpack.c.l.b16 %v287
    %v2328 = vunpack.c.l.b16 %v288
    %v2329 = vunpack.c.l.b16 %v289
    %v2330 = vunpack.c.l.b16 %v290
    %v2331 = vunpack.c.l.b16 %v291
    %v2332 = vunpack.c.l.b16 %v292
    %v2333 = vunpack.c.l.b16 %v293
    %v2334 = vunpack.c.l.b16 %v294
    %v2335 = vunpack.c.l.b16 %v295
    %v2336 = vunpack.c.l.b16 %v296
    %v2337 = vunpack.c.l.b16 %v297
    %v2338 = vunpack.c.l.b16 %v298
    %v2339 = vunpack.c.l.b16 %v299
    %v2340 = vunpack.c.l.b16 %v300
    %v2341 = vunpack.c.l.b16 %v301
    %v2342 = vunpack.c.l.b16 %v302
    %v2343 = vunpack.c.l.b16 %v303
    %v2344 = vunpack.c.l.b16 %v304
    %v2345 = vunpack.c.l.b16 %v305
    %v2346 = vunpack.c.l.b16 %v306
    %v2347 = vunpack.c.l.b16 %v307
    %v2348 = vunpack.c.l.b16 %v308
    %v2349 = vunpack.c.l.b16 %v309
    %v2350 = vunpack.c.l.b16 %v310
    %v2351 = vunpack.c.l.b16 %v311
    %v2352 = vunpack.c.l.b16 %v312
    %v2353 = vunpack.c.l.b16 %v313
    %v2354 = vunpack.c.l.b16 %v314
    %v2355 = vunpack.c.l.b16 %v315
    %v2356 = vunpack.c.l.b16 %v316
    %v2357 = vunpack.c.l.b16 %v317
    %v2358 = vunpack.c.l.b16 %v318
    %v2359 = vunpack.c.l.b16 %v319
    %v2360 = vunpack.c.l.b16 %v320
    %v2361 = vunpack.c.l.b16 %v321
    %v2362 = vunpack.c.l.b16 %v322
    %v2363 = vunpack.c.l.b16 %v323
    %v2364 = vunpack.c.l.b16 %v324
    %v2365 = vunpack.c.l.b16 %v325
    %v2366 = vunpack.c.l.b16 %v326
    %v2367 = vunpack.c.l.b16 %v327
    %v2368 = vunpack.c.l.b16 %v328
    %v2369 = vunpack.c.l.b16 %v329
    %v2370 = vunpack.c.l.b16 %v330
    %v2371 = vunpack.c.l.b16 %v331
    %v2372 = vunpack.c.l.b16 %v332
    %v2373 = vunpack.c.l.b16 %v333
    %v2374 = vunpack.c.l.b16 %v334
    %v2375 = vunpack.c.l.b16 %v335
    %v2376 = vunpack.c.l.b16 %v336
    %v2377 = vunpack.c.l.b16 %v337
    %v2378 = vunpack.c.l.b16 %v338
    %v2379 = vunpack.c.l.b16 %v339
    %v2380 = vunpack.c.l.b16 %v340
    %v2381 = vunpack.c.l.b16 %v341
    %v2382 = vunpack.c.l.b16 %v342
    %v2383 = vunpack.c.l.b16 %v343
    %v2384 = vunpack.c.l.b16 %v344
    %v2385 = vunpack.c.l.b16 %v345
    %v2386 = vunpack.c.l.b16 %v346
    %v2387 = vunpack.c.l.b16 %v347
    %v2388 = vunpack.c.l.b16 %v348
    %v2389 = vpack.c.b16 %v2134, %v2133
    %v2390 = vpack.c.b16 %v2136, %v2135
    %v2391 = vpack.c.b16 %v2138, %v2137
    %v2392 = vpack.c.b16 %v2140, %v2139
    %v2393 = vpack.c.b16 %v2142, %v2141
    %v2394 = vpack.c.b16 %v2144, %v2143
    %v2395 = vpack.c.b16 %v2146, %v2145
    %v2396 = vpack.c.b16 %v2148, %v2147
    %v2397 = vpack.c.b16 %v2150, %v2149
    %v2398 = vpack.c.b16 %v2152, %v2151
    %v2399 = vpack.c.b16 %v2154, %v2153
    %v2400 = vpack.c.b16 %v2156, %v2155
    %v2401 = vpack.c.b16 %v2158, %v2157
    %v2402 = vpack.c.b16 %v2160, %v2159
    %v2403 = vpack.c.b16 %v2162, %v2161
    %v2404 = vpack.c.b16 %v2164, %v2163
    %v2405 = vpack.c.b16 %v2166, %v2165
    %v2406 = vpack.c.b16 %v2168, %v2167
    %v2407 = vpack.c.b16 %v2170, %v2169
    %v2408 = vpack.c.b16 %v2172, %v2171
    %v2409 = vpack.c.b16 %v2174, %v2173
    %v2410 = vpack.c.b16 %v2176, %v2175
    %v2411 = vpack.c.b16 %v2178, %v2177
    %v2412 = vpack.c.b16 %v2180, %v2179
    %v2413 = vpack.c.b16 %v2182, %v2181
    %v2414 = vpack.c.b16 %v2184, %v2183
    %v2415 = vpack.c.b16 %v2186, %v2185
    %v2416 = vpack.c.b16 %v2188, %v2187
    %v2417 = vpack.c.b16 %v2190, %v2189
    %v2418 = vpack.c.b16 %v2192, %v2191
    %v2419 = vpack.c.b16 %v2194, %v2193
    %v2420 = vpack.c.b16 %v2196, %v2195
    %v2421 = vpack.c.b16 %v2198, %v2197
    %v2422 = vpack.c.b16 %v2200, %v2199
    %v2423 = vpack.c.b16 %v2202, %v2201
    %v2424 = vpack.c.b16 %v2204, %v2203
    %v2425 = vpack.c.b16 %v2206, %v2205
    %v2426 = vpack.c.b16 %v2208, %v2207
    %v2427 = vpack.c.b16 %v2210, %v2209
    %v2428 = vpack.c.b16 %v2212, %v2211
    %v2429 = vpack.c.b16 %v2214, %v2213
    %v2430 = vpack.c.b16 %v2216, %v2215
    %v2431 = vpack.c.b16 %v2218, %v2217
    %v2432 = vpack.c.b16 %v2220, %v2219
    %v2433 = vpack.c.b16 %v2222, %v2221
    %v2434 = vpack.c.b16 %v2224, %v2223
    %v2435 = vpack.c.b16 %v2226, %v2225
    %v2436 = vpack.c.b16 %v2228, %v2227
    %v2437 = vpack.c.b16 %v2230, %v2229
    %v2438 = vpack.c.b16 %v2232, %v2231
    %v2439 = vpack.c.b16 %v2234, %v2233
    %v2440 = vpack.c.b16 %v2236, %v2235
    %v2441 = vpack.c.b16 %v2238, %v2237
    %v2442 = vpack.c.b16 %v2240, %v2239
    %v2443 = vpack.c.b16 %v2242, %v2241
    %v2444 = vpack.c.b16 %v2244, %v2243
    %v2445 = vpack.c.b16 %v2246, %v2245
    %v2446 = vpack.c.b16 %v2248, %v2247
    %v2447 = vpack.c.b16 %v2250, %v2249
    %v2448 = vpack.c.b16 %v2252, %v2251
    %v2449 = vpack.c.b16 %v2254, %v2253
    %v2450 = vpack.c.b16 %v2256, %v2255
    %v2451 = vpack.c.b16 %v2258, %v2257
    %v2452 = vpack.c.b16 %v2260, %v2259
    %v2453 = vpack.c.b16 %v2262, %v2261
    %v2454 = vpack.c.b16 %v2264, %v2263
    %v2455 = vpack.c.b16 %v2266, %v2265
    %v2456 = vpack.c.b16 %v2268, %v2267
    %v2457 = vpack.c.b16 %v2270, %v2269
    %v2458 = vpack.c.b16 %v2272, %v2271
    %v2459 = vpack.c.b16 %v2274, %v2273
    %v2460 = vpack.c.b16 %v2276, %v2275
    %v2461 = vpack.c.b16 %v2278, %v2277
    %v2462 = vpack.c.b16 %v2280, %v2279
    %v2463 = vpack.c.b16 %v2282, %v2281
    %v2464 = vpack.c.b16 %v2284, %v2283
    %v2465 = vpack.c.b16 %v2286, %v2285
    %v2466 = vpack.c.b16 %v2288, %v2287
    %v2467 = vpack.c.b16 %v2290, %v2289
    %v2468 = vpack.c.b16 %v2292, %v2291
    %v2469 = vpack.c.b16 %v2294, %v2293
    %v2470 = vpack.c.b16 %v2296, %v2295
    %v2471 = vpack.c.b16 %v2298, %v2297
    %v2472 = vpack.c.b16 %v2300, %v2299
    %v2473 = vpack.c.b16 %v2302, %v2301
    %v2474 = vpack.c.b16 %v2304, %v2303
    %v2475 = vpack.c.b16 %v2306, %v2305
    %v2476 = vpack.c.b16 %v2308, %v2307
    %v2477 = vpack.c.b16 %v2310, %v2309
    %v2478 = vpack.c.b16 %v2312, %v2311
    %v2479 = vpack.c.b16 %v2314, %v2313
    %v2480 = vpack.c.b16 %v2316, %v2315
    %v2481 = vpack.c.b16 %v2318, %v2317
    %v2482 = vpack.c.b16 %v2320, %v2319
    %v2483 = vpack.c.b16 %v2322, %v2321
    %v2484 = vpack.c.b16 %v2324, %v2323
    %v2485 = vpack.c.b16 %v2326, %v2325
    %v2486 = vpack.c.b16 %v2328, %v2327
    %v2487 = vpack.c.b16 %v2330, %v2329
    %v2488 = vpack.c.b16 %v2332, %v2331
    %v2489 = vpack.c.b16 %v2334, %v2333
    %v2490 = vpack.c.b16 %v2336, %v2335
    %v2491 = vpack.c.b16 %v2338, %v2337
    %v2492 = vpack.c.b16 %v2340, %v2339
    %v2493 = vpack.c.b16 %v2342, %v2341
    %v2494 = vpack.c.b16 %v2344, %v2343
    %v2495 = vpack.c.b16 %v2346, %v2345
    %v2496 = vpack.c.b16 %v2348, %v2347
    %v2497 = vpack.c.b16 %v2350, %v2349
    %v2498 = vpack.c.b16 %v2352, %v2351
    %v2499 = vpack.c.b16 %v2354, %v2353
    %v2500 = vpack.c.b16 %v2356, %v2355
    %v2501 = vpack.c.b16 %v2358, %v2357
    %v2502 = vpack.c.b16 %v2360, %v2359
    %v2503 = vpack.c.b16 %v2362, %v2361
    %v2504 = vpack.c.b16 %v2364, %v2363
    %v2505 = vpack.c.b16 %v2366, %v2365
    %v2506 = vpack.c.b16 %v2368, %v2367
    %v2507 = vpack.c.b16 %v2370, %v2369
    %v2508 = vpack.c.b16 %v2372, %v2371
    %v2509 = vpack.c.b16 %v2374, %v2373
    %v2510 = vpack.c.b16 %v2376, %v2375
    %v2511 = vpack.c.b16 %v2378, %v2377
    %v2512 = vpack.c.b16 %v2380, %v2379
    %v2513 = vpack.c.b16 %v2382, %v2381
    %v2514 = vpack.c.b16 %v2384, %v2383
    %v2515 = vpack.c.b16 %v2386, %v2385
    %v2516 = vpack.c.b16 %v2388, %v2387
    %2645 = vmatprep.subr.bf16.mxu0 0
    %2646 = vmatpush1.bf16.msra.mxu0 %v2389
    %2647 = vmatprep.subr.bf16.mxu0 0
    %2648 = vmatpush1.bf16.msra.mxu0 %v2390
    %2649 = vmatprep.subr.bf16.mxu0 0
    %2650 = vmatpush1.bf16.msra.mxu0 %v2391
    %2651 = vmatprep.subr.bf16.mxu0 0
    %2652 = vmatpush1.bf16.msra.mxu0 %v2392
    %2653 = vmatprep.subr.bf16.mxu0 0
    %2654 = vmatpush1.bf16.msra.mxu0 %v2393
    %2655 = vmatprep.subr.bf16.mxu0 0
    %2656 = vmatpush1.bf16.msra.mxu0 %v2394
    %2657 = vmatprep.subr.bf16.mxu0 0
    %2658 = vmatpush1.bf16.msra.mxu0 %v2395
    %2659 = vmatprep.subr.bf16.mxu0 0
    %2660 = vmatpush1.bf16.msra.mxu0 %v2396
    %2661 = vmatprep.subr.bf16.mxu0 0
    %2662 = vmatpush1.bf16.msra.mxu0 %v2397
    %2663 = vmatprep.subr.bf16.mxu0 0
    %2664 = vmatpush1.bf16.msra.mxu0 %v2398
    %2665 = vmatprep.subr.bf16.mxu0 0
    %2666 = vmatpush1.bf16.msra.mxu0 %v2399
    %2667 = vmatprep.subr.bf16.mxu0 0
    %2668 = vmatpush1.bf16.msra.mxu0 %v2400
    %2669 = vmatprep.subr.bf16.mxu0 0
    %2670 = vmatpush1.bf16.msra.mxu0 %v2401
    %2671 = vmatprep.subr.bf16.mxu0 0
    %2672 = vmatpush1.bf16.msra.mxu0 %v2402
    %2673 = vmatprep.subr.bf16.mxu0 0
    %2674 = vmatpush1.bf16.msra.mxu0 %v2403
    %2675 = vmatprep.subr.bf16.mxu0 0
    %2676 = vmatpush1.bf16.msra.mxu0 %v2404
    %2677 = vmatprep.mubr.bf16.mxu0 %v1846
    %2678 = vmatmul.mubr.bf16.gmra.mrb[0].mxu0 %v1845
    %v2679 = vpop.f32.mrb[0].mxu0
    %v2680 = vadd.f32 %v1791, %v2679
    %v2681 = vpop.f32.mrb[0].mxu0
    %v2682 = vpop.f32.mrb[0].mxu0
    %v2683 = vadd.f32 %v1794, %v2682
    %v2684 = vpop.f32.mrb[0].mxu0
    %2685 = vdwg.mxu0
    %2686 = vmatprep.subr.bf16.mxu0 0
    %2687 = vmatpush1.bf16.msra.mxu0 %v2405
    %2688 = vmatprep.subr.bf16.mxu0 0
    %2689 = vmatpush1.bf16.msra.mxu0 %v2406
    %2690 = vmatprep.subr.bf16.mxu0 0
    %2691 = vmatpush1.bf16.msra.mxu0 %v2407
    %2692 = vmatprep.subr.bf16.mxu0 0
    %2693 = vmatpush1.bf16.msra.mxu0 %v2408
    %2694 = vmatprep.subr.bf16.mxu0 0
    %2695 = vmatpush1.bf16.msra.mxu0 %v2409
    %2696 = vmatprep.subr.bf16.mxu0 0
    %2697 = vmatpush1.bf16.msra.mxu0 %v2410
    %2698 = vmatprep.subr.bf16.mxu0 0
    %2699 = vmatpush1.bf16.msra.mxu0 %v2411
    %2700 = vmatprep.subr.bf16.mxu0 0
    %2701 = vmatpush1.bf16.msra.mxu0 %v2412
    %2702 = vmatprep.subr.bf16.mxu0 0
    %2703 = vmatpush1.bf16.msra.mxu0 %v2413
    %2704 = vmatprep.subr.bf16.mxu0 0
    %2705 = vmatpush1.bf16.msra.mxu0 %v2414
    %2706 = vmatprep.subr.bf16.mxu0 0
    %2707 = vmatpush1.bf16.msra.mxu0 %v2415
    %2708 = vmatprep.subr.bf16.mxu0 0
    %2709 = vmatpush1.bf16.msra.mxu0 %v2416
    %2710 = vmatprep.subr.bf16.mxu0 0
    %2711 = vmatpush1.bf16.msra.mxu0 %v2417
    %2712 = vmatprep.subr.bf16.mxu0 0
    %2713 = vmatpush1.bf16.msra.mxu0 %v2418
    %2714 = vmatprep.subr.bf16.mxu0 0
    %2715 = vmatpush1.bf16.msra.mxu0 %v2419
    %2716 = vmatprep.subr.bf16.mxu0 0
    %2717 = vmatpush1.bf16.msra.mxu0 %v2420
    %2718 = vmatprep.mubr.bf16.mxu0 %v1848
    %2719 = vmatmul.mubr.bf16.gmra.mrb[0].mxu0 %v1847
    %v2720 = vpop.f32.mrb[0].mxu0
    %v2721 = vadd.f32 %v2680, %v2720
    %v2722 = vpop.f32.mrb[0].mxu0
    %v2723 = vpop.f32.mrb[0].mxu0
    %v2724 = vadd.f32 %v2683, %v2723
    %v2725 = vpop.f32.mrb[0].mxu0
    %2726 = vdwg.mxu0
    %2727 = vmatprep.subr.bf16.mxu0 0
    %2728 = vmatpush1.bf16.msra.mxu0 %v2421
    %2729 = vmatprep.subr.bf16.mxu0 0
    %2730 = vmatpush1.bf16.msra.mxu0 %v2422
    %2731 = vmatprep.subr.bf16.mxu0 0
    %2732 = vmatpush1.bf16.msra.mxu0 %v2423
    %2733 = vmatprep.subr.bf16.mxu0 0
    %2734 = vmatpush1.bf16.msra.mxu0 %v2424
    %2735 = vmatprep.subr.bf16.mxu0 0
    %2736 = vmatpush1.bf16.msra.mxu0 %v2425
    %2737 = vmatprep.subr.bf16.mxu0 0
    %2738 = vmatpush1.bf16.msra.mxu0 %v2426
    %2739 = vmatprep.subr.bf16.mxu0 0
    %2740 = vmatpush1.bf16.msra.mxu0 %v2427
    %2741 = vmatprep.subr.bf16.mxu0 0
    %2742 = vmatpush1.bf16.msra.mxu0 %v2428
    %2743 = vmatprep.subr.bf16.mxu0 0
    %2744 = vmatpush1.bf16.msra.mxu0 %v2429
    %2745 = vmatprep.subr.bf16.mxu0 0
    %2746 = vmatpush1.bf16.msra.mxu0 %v2430
    %2747 = vmatprep.subr.bf16.mxu0 0
    %2748 = vmatpush1.bf16.msra.mxu0 %v2431
    %2749 = vmatprep.subr.bf16.mxu0 0
    %2750 = vmatpush1.bf16.msra.mxu0 %v2432
    %2751 = vmatprep.subr.bf16.mxu0 0
    %2752 = vmatpush1.bf16.msra.mxu0 %v2433
    %2753 = vmatprep.subr.bf16.mxu0 0
    %2754 = vmatpush1.bf16.msra.mxu0 %v2434
    %2755 = vmatprep.subr.bf16.mxu0 0
    %2756 = vmatpush1.bf16.msra.mxu0 %v2435
    %2757 = vmatprep.subr.bf16.mxu0 0
    %2758 = vmatpush1.bf16.msra.mxu0 %v2436
    %2759 = vmatprep.mubr.bf16.mxu0 %v1850
    %2760 = vmatmul.mubr.bf16.gmra.mrb[0].mxu0 %v1849
    %v2761 = vpop.f32.mrb[0].mxu0
    %v2762 = vadd.f32 %v2721, %v2761
    %v2763 = vpop.f32.mrb[0].mxu0
    %v2764 = vpop.f32.mrb[0].mxu0
    %v2765 = vadd.f32 %v2724, %v2764
    %v2766 = vpop.f32.mrb[0].mxu0
    %2767 = vdwg.mxu0
    %2768 = vmatprep.subr.bf16.mxu0 0
    %2769 = vmatpush1.bf16.msra.mxu0 %v2437
    %2770 = vmatprep.subr.bf16.mxu0 0
    %2771 = vmatpush1.bf16.msra.mxu0 %v2438
    %2772 = vmatprep.subr.bf16.mxu0 0
    %2773 = vmatpush1.bf16.msra.mxu0 %v2439
    %2774 = vmatprep.subr.bf16.mxu0 0
    %2775 = vmatpush1.bf16.msra.mxu0 %v2440
    %2776 = vmatprep.subr.bf16.mxu0 0
    %2777 = vmatpush1.bf16.msra.mxu0 %v2441
    %2778 = vmatprep.subr.bf16.mxu0 0
    %2779 = vmatpush1.bf16.msra.mxu0 %v2442
    %2780 = vmatprep.subr.bf16.mxu0 0
    %2781 = vmatpush1.bf16.msra.mxu0 %v2443
    %2782 = vmatprep.subr.bf16.mxu0 0
    %2783 = vmatpush1.bf16.msra.mxu0 %v2444
    %2784 = vmatprep.subr.bf16.mxu0 0
    %2785 = vmatpush1.bf16.msra.mxu0 %v2445
    %2786 = vmatprep.subr.bf16.mxu0 0
    %2787 = vmatpush1.bf16.msra.mxu0 %v2446
    %2788 = vmatprep.subr.bf16.mxu0 0
    %2789 = vmatpush1.bf16.msra.mxu0 %v2447
    %2790 = vmatprep.subr.bf16.mxu0 0
    %2791 = vmatpush1.bf16.msra.mxu0 %v2448
    %2792 = vmatprep.subr.bf16.mxu0 0
    %2793 = vmatpush1.bf16.msra.mxu0 %v2449
    %2794 = vmatprep.subr.bf16.mxu0 0
    %2795 = vmatpush1.bf16.msra.mxu0 %v2450
    %2796 = vmatprep.subr.bf16.mxu0 0
    %2797 = vmatpush1.bf16.msra.mxu0 %v2451
    %2798 = vmatprep.subr.bf16.mxu0 0
    %2799 = vmatpush1.bf16.msra.mxu0 %v2452
    %2800 = vmatprep.mubr.bf16.mxu0 %v1852
    %2801 = vmatmul.mubr.bf16.gmra.mrb[0].mxu0 %v1851
    %v2802 = vpop.f32.mrb[0].mxu0
    %v2803 = vadd.f32 %v2762, %v2802
    %v2804 = vpop.f32.mrb[0].mxu0
    %v2805 = vpop.f32.mrb[0].mxu0
    %v2806 = vadd.f32 %v2765, %v2805
    %v2807 = vpop.f32.mrb[0].mxu0
    %2808 = vdwg.mxu0
    %2809 = vmatprep.subr.bf16.mxu0 0
    %2810 = vmatpush1.bf16.msra.mxu0 %v2453
    %2811 = vmatprep.subr.bf16.mxu0 0
    %2812 = vmatpush1.bf16.msra.mxu0 %v2454
    %2813 = vmatprep.subr.bf16.mxu0 0
    %2814 = vmatpush1.bf16.msra.mxu0 %v2455
    %2815 = vmatprep.subr.bf16.mxu0 0
    %2816 = vmatpush1.bf16.msra.mxu0 %v2456
    %2817 = vmatprep.subr.bf16.mxu0 0
    %2818 = vmatpush1.bf16.msra.mxu0 %v2457
    %2819 = vmatprep.subr.bf16.mxu0 0
    %2820 = vmatpush1.bf16.msra.mxu0 %v2458
    %2821 = vmatprep.subr.bf16.mxu0 0
    %2822 = vmatpush1.bf16.msra.mxu0 %v2459
    %2823 = vmatprep.subr.bf16.mxu0 0
    %2824 = vmatpush1.bf16.msra.mxu0 %v2460
    %2825 = vmatprep.subr.bf16.mxu0 0
    %2826 = vmatpush1.bf16.msra.mxu0 %v2461
    %2827 = vmatprep.subr.bf16.mxu0 0
    %2828 = vmatpush1.bf16.msra.mxu0 %v2462
    %2829 = vmatprep.subr.bf16.mxu0 0
    %2830 = vmatpush1.bf16.msra.mxu0 %v2463
    %2831 = vmatprep.subr.bf16.mxu0 0
    %2832 = vmatpush1.bf16.msra.mxu0 %v2464
    %2833 = vmatprep.subr.bf16.mxu0 0
    %2834 = vmatpush1.bf16.msra.mxu0 %v2465
    %2835 = vmatprep.subr.bf16.mxu0 0
    %2836 = vmatpush1.bf16.msra.mxu0 %v2466
    %2837 = vmatprep.subr.bf16.mxu0 0
    %2838 = vmatpush1.bf16.msra.mxu0 %v2467
    %2839 = vmatprep.subr.bf16.mxu0 0
    %2840 = vmatpush1.bf16.msra.mxu0 %v2468
    %2841 = vmatprep.mubr.bf16.mxu0 %v1854
    %2842 = vmatmul.mubr.bf16.gmra.mrb[0].mxu0 %v1853
    %v2843 = vpop.f32.mrb[0].mxu0
    %v2844 = vadd.f32 %v2803, %v2843
    %v2845 = vpop.f32.mrb[0].mxu0
    %v2846 = vpop.f32.mrb[0].mxu0
    %v2847 = vadd.f32 %v2806, %v2846
    %v2848 = vpop.f32.mrb[0].mxu0
    %2849 = vdwg.mxu0
    %2850 = vmatprep.subr.bf16.mxu0 0
    %2851 = vmatpush1.bf16.msra.mxu0 %v2469
    %2852 = vmatprep.subr.bf16.mxu0 0
    %2853 = vmatpush1.bf16.msra.mxu0 %v2470
    %2854 = vmatprep.subr.bf16.mxu0 0
    %2855 = vmatpush1.bf16.msra.mxu0 %v2471
    %2856 = vmatprep.subr.bf16.mxu0 0
    %2857 = vmatpush1.bf16.msra.mxu0 %v2472
    %2858 = vmatprep.subr.bf16.mxu0 0
    %2859 = vmatpush1.bf16.msra.mxu0 %v2473
    %2860 = vmatprep.subr.bf16.mxu0 0
    %2861 = vmatpush1.bf16.msra.mxu0 %v2474
    %2862 = vmatprep.subr.bf16.mxu0 0
    %2863 = vmatpush1.bf16.msra.mxu0 %v2475
    %2864 = vmatprep.subr.bf16.mxu0 0
    %2865 = vmatpush1.bf16.msra.mxu0 %v2476
    %2866 = vmatprep.subr.bf16.mxu0 0
    %2867 = vmatpush1.bf16.msra.mxu0 %v2477
    %2868 = vmatprep.subr.bf16.mxu0 0
    %2869 = vmatpush1.bf16.msra.mxu0 %v2478
    %2870 = vmatprep.subr.bf16.mxu0 0
    %2871 = vmatpush1.bf16.msra.mxu0 %v2479
    %2872 = vmatprep.subr.bf16.mxu0 0
    %2873 = vmatpush1.bf16.msra.mxu0 %v2480
    %2874 = vmatprep.subr.bf16.mxu0 0
    %2875 = vmatpush1.bf16.msra.mxu0 %v2481
    %2876 = vmatprep.subr.bf16.mxu0 0
    %2877 = vmatpush1.bf16.msra.mxu0 %v2482
    %2878 = vmatprep.subr.bf16.mxu0 0
    %2879 = vmatpush1.bf16.msra.mxu0 %v2483
    %2880 = vmatprep.subr.bf16.mxu0 0
    %2881 = vmatpush1.bf16.msra.mxu0 %v2484
    %2882 = vmatprep.mubr.bf16.mxu0 %v1856
    %2883 = vmatmul.mubr.bf16.gmra.mrb[0].mxu0 %v1855
    %v2884 = vpop.f32.mrb[0].mxu0
    %v2885 = vadd.f32 %v2844, %v2884
    %v2886 = vpop.f32.mrb[0].mxu0
    %v2887 = vpop.f32.mrb[0].mxu0
    %v2888 = vadd.f32 %v2847, %v2887
    %v2889 = vpop.f32.mrb[0].mxu0
    %2890 = vdwg.mxu0
    %2891 = vmatprep.subr.bf16.mxu0 0
    %2892 = vmatpush1.bf16.msra.mxu0 %v2485
    %2893 = vmatprep.subr.bf16.mxu0 0
    %2894 = vmatpush1.bf16.msra.mxu0 %v2486
    %2895 = vmatprep.subr.bf16.mxu0 0
    %2896 = vmatpush1.bf16.msra.mxu0 %v2487
    %2897 = vmatprep.subr.bf16.mxu0 0
    %2898 = vmatpush1.bf16.msra.mxu0 %v2488
    %2899 = vmatprep.subr.bf16.mxu0 0
    %2900 = vmatpush1.bf16.msra.mxu0 %v2489
    %2901 = vmatprep.subr.bf16.mxu0 0
    %2902 = vmatpush1.bf16.msra.mxu0 %v2490
    %2903 = vmatprep.subr.bf16.mxu0 0
    %2904 = vmatpush1.bf16.msra.mxu0 %v2491
    %2905 = vmatprep.subr.bf16.mxu0 0
    %2906 = vmatpush1.bf16.msra.mxu0 %v2492
    %2907 = vmatprep.subr.bf16.mxu0 0
    %2908 = vmatpush1.bf16.msra.mxu0 %v2493
    %2909 = vmatprep.subr.bf16.mxu0 0
    %2910 = vmatpush1.bf16.msra.mxu0 %v2494
    %2911 = vmatprep.subr.bf16.mxu0 0
    %2912 = vmatpush1.bf16.msra.mxu0 %v2495
    %2913 = vmatprep.subr.bf16.mxu0 0
    %2914 = vmatpush1.bf16.msra.mxu0 %v2496
    %2915 = vmatprep.subr.bf16.mxu0 0
    %2916 = vmatpush1.bf16.msra.mxu0 %v2497
    %2917 = vmatprep.subr.bf16.mxu0 0
    %2918 = vmatpush1.bf16.msra.mxu0 %v2498
    %2919 = vmatprep.subr.bf16.mxu0 0
    %2920 = vmatpush1.bf16.msra.mxu0 %v2499
    %2921 = vmatprep.subr.bf16.mxu0 0
    %2922 = vmatpush1.bf16.msra.mxu0 %v2500
    %2923 = vmatprep.mubr.bf16.mxu0 %v1858
    %2924 = vmatmul.mubr.bf16.gmra.mrb[0].mxu0 %v1857
    %v2925 = vpop.f32.mrb[0].mxu0
    %v2926 = vadd.f32 %v2885, %v2925
    %v2927 = vpop.f32.mrb[0].mxu0
    %v2928 = vpop.f32.mrb[0].mxu0
    %v2929 = vadd.f32 %v2888, %v2928
    %v2930 = vpop.f32.mrb[0].mxu0
    %2931 = vdwg.mxu0
    %2932 = vmatprep.subr.bf16.mxu0 0
    %2933 = vmatpush1.bf16.msra.mxu0 %v2501
    %2934 = vmatprep.subr.bf16.mxu0 0
    %2935 = vmatpush1.bf16.msra.mxu0 %v2502
    %2936 = vmatprep.subr.bf16.mxu0 0
    %2937 = vmatpush1.bf16.msra.mxu0 %v2503
    %2938 = vmatprep.subr.bf16.mxu0 0
    %2939 = vmatpush1.bf16.msra.mxu0 %v2504
    %2940 = vmatprep.subr.bf16.mxu0 0
    %2941 = vmatpush1.bf16.msra.mxu0 %v2505
    %2942 = vmatprep.subr.bf16.mxu0 0
    %2943 = vmatpush1.bf16.msra.mxu0 %v2506
    %2944 = vmatprep.subr.bf16.mxu0 0
    %2945 = vmatpush1.bf16.msra.mxu0 %v2507
    %2946 = vmatprep.subr.bf16.mxu0 0
    %2947 = vmatpush1.bf16.msra.mxu0 %v2508
    %2948 = vmatprep.subr.bf16.mxu0 0
    %2949 = vmatpush1.bf16.msra.mxu0 %v2509
    %2950 = vmatprep.subr.bf16.mxu0 0
    %2951 = vmatpush1.bf16.msra.mxu0 %v2510
    %2952 = vmatprep.subr.bf16.mxu0 0
    %2953 = vmatpush1.bf16.msra.mxu0 %v2511
    %2954 = vmatprep.subr.bf16.mxu0 0
    %2955 = vmatpush1.bf16.msra.mxu0 %v2512
    %2956 = vmatprep.subr.bf16.mxu0 0
    %2957 = vmatpush1.bf16.msra.mxu0 %v2513
    %2958 = vmatprep.subr.bf16.mxu0 0
    %2959 = vmatpush1.bf16.msra.mxu0 %v2514
    %2960 = vmatprep.subr.bf16.mxu0 0
    %2961 = vmatpush1.bf16.msra.mxu0 %v2515
    %2962 = vmatprep.subr.bf16.mxu0 0
    %2963 = vmatpush1.bf16.msra.mxu0 %v2516
    %2964 = vmatprep.mubr.bf16.mxu0 %v1860
    %2965 = vmatmul.mubr.bf16.gmra.mrb[0].mxu0 %v1859
    %v2966 = vpop.f32.mrb[0].mxu0
    %v2967 = vadd.f32 %v2926, %v2966
    %v2968 = vpop.f32.mrb[0].mxu0
    %v2969 = vpop.f32.mrb[0].mxu0
    %v2970 = vadd.f32 %v2929, %v2969
    %v2971 = vpop.f32.mrb[0].mxu0
    %2972 = vdwg.mxu0
    %v2973 = vld [vmem:[%s4] sm:$0x1]
    %v2975 = vlaneseq
    %v2976 = vshrl.u32 %v2975, 7
    %v2977 = vsub.s32 0, %v2976
    %v2978 = vrot.slane %v2973, %v2977
    %v2980 = vadd.f32 %v2967, %v2978
    %v2981 = vadd.f32 %v2970, %v2978
    %2982 = vst [vmem:[#allocation10] sm:$0xff] %v2980
    %2983 = vst [vmem:[#allocation10 + $0x8] sm:$0xff] %v2981
    // Predicated region
    $region38: #{tpu_custom_call.1} parent=1 // pred_check
      _
    $region39: #{tpu_custom_call.1} parent=1 // pred_check_branch
      %2985 = sbr.rel (0) target = $region41
    $region40: #{tpu_custom_call.1} parent=1 // pred_region
      %s2987 = ssub.s32 256, 256
      %2988 = vsyncadd [#allocation4], %s2987
      %s2989 = sshll.u32 [#allocation10], 4
      %s2990 = int_to_ptr.vmem [resolvable:$true] %s2989
      %2995 = dma.vmem_to_hbm [thread:$0]  %s2990, 256, %s5, [#allocation4], 128, 128, 8
    $region41: #{tpu_custom_call.1} parent=1 // pred_fallthru
      _
    // Predicated region
    $region42: #{tpu_custom_call.1} parent=1 // pred_check
      _
    $region43: #{tpu_custom_call.1} parent=1 // pred_check_branch
      %2997 = sbr.rel (0) target = $region45
    $region44: #{tpu_custom_call.1} parent=1 // pred_region
      %2998 = dma.done [#allocation4], 256
    $region45: #{tpu_custom_call.1} parent=1 // pred_fallthru
      _
    %2999 = vsyncpa [#allocation3], 1
    %3000 = vsyncpa [#allocation6], 1
    %3001 = vsyncpa [#allocation9], 1
    %3002 = vsyncpa [#allocation4], 1

</llo_original>
